<compile_context>
chip_gen: v7x
topology: tpu7x:2x2x1
jax: 0.10.0
libtpu: 0.0.40
codegen_flags: <defaults>
</compile_context>

<pallas_src>
import numpy as np
import jax
import jax.numpy as jnp
from jax.experimental import pallas as pl
from jax.experimental.pallas import tpu as pltpu


def to_3tuple(value):
    if not isinstance(value, tuple):
        return (value, value, value)
    return value


def _cdiv(a, b):
    return -(-a // b)


def _round_up(a, b):
    return _cdiv(a, b) * b


def _gaussian_1d(size, std):
    """Normalized 1-D gaussian taps (separable factor of the PyTorch buffer)."""
    mean = (size - 1) / 2.0
    g = np.exp(-(((np.arange(size, dtype=np.float64) - mean) / std) ** 2) / 2.0)
    return (g / g.sum()).astype(np.float32)


def _gaussian_weights_3d(kernel_size, sigma):
    """Full (kD,kH,kW) product kernel (used only by the pure-JAX reference)."""
    ks = to_3tuple(kernel_size)
    sg = to_3tuple(sigma)
    gd = _gaussian_1d(ks[0], sg[0]).astype(np.float64)
    gh = _gaussian_1d(ks[1], sg[1]).astype(np.float64)
    gw = _gaussian_1d(ks[2], sg[2]).astype(np.float64)
    k = gd[:, None, None] * gh[None, :, None] * gw[None, None, :]
    return (k / k.sum()).astype(np.float32)


def _vmem_capacity_bytes():
    """Per-core VMEM capacity; conservative (v7x) fallback if the query fails."""
    try:
        info = pltpu.get_tpu_info()
        cap = getattr(info, "vmem_capacity_bytes", None)
        if cap:
            return int(cap)
    except Exception:
        pass
    return 64 * 1024 * 1024


def _pick_tile_d(Do, halo_d, Hp, Wp_p, Ho, Wo_p, lane_block, n_lane_blocks, budget):
    """Largest D-tile (a multiple of the halo depth) whose live VMEM fits."""
    step = max(halo_d, 1)

    def live_bytes(td):
        win = (td + halo_d) * Hp * Wp_p      # assembled halo'd window scratch
        t1 = td * Hp * Wp_p                  # after D pass
        t2 = td * Ho * Wp_p                  # after H pass
        inp = 2 * td * Hp * Wp_p             # double-buffered main input block
        hal = 2 * halo_d * Hp * Wp_p         # double-buffered halo block
        out = 2 * td * Ho * Wo_p             # double-buffered output block
        return 4 * lane_block * (win + t1 + t2 + inp + hal + out)

    td_cap = _round_up(max(Do, 1), step)
    td = step
    while td + step <= td_cap and live_bytes(td + step) <= budget:
        td += step
    # With a single channel block, keep >= 2 grid steps along D so both
    # TensorCores (v7x megacore) get work and the pipeline has >1 stage.
    if n_lane_blocks == 1:
        td = min(td, max(step, _round_up(_cdiv(Do, 2), step)))
    return td


def _make_kernel(taps_d, taps_h, taps_w, tile_d, halo_d, Ho, Wo_p):
    """Kernel body with the 1-D gaussian taps baked in as constants."""
    win_d = tile_d + halo_d
    wD = [float(v) for v in taps_d]
    wH = [float(v) for v in taps_h]
    wW = [float(v) for v in taps_w]

    def _sym(read, w):
        # Gaussian taps are symmetric (w[i] == w[k-1-i]); pair the shifted
        # slices so each pair costs one multiply instead of two (no f32 FMA
        # on the VPU, so every saved vmul matters).
        k = len(w)
        acc = None
        for i in range(k // 2):
            term = (read(i) + read(k - 1 - i)) * w[i]
            acc = term if acc is None else acc + term
        if k % 2 == 1:
            mid = k // 2
            term = read(mid) * w[mid]
            acc = term if acc is None else acc + term
        return acc

    def _body(x_main_ref, x_halo_ref, o_ref, win_ref, t1_ref, t2_ref):
        # Assemble the contiguous (tile_d + kD - 1)-deep window in f32 VMEM.
        win_ref[0:tile_d] = x_main_ref[...].astype(jnp.float32)
        if halo_d:
            win_ref[tile_d:win_d] = x_halo_ref[...].astype(jnp.float32)
        # Pass 1: D (leading dim -> pure address offsets, no lane movement).
        t1_ref[...] = _sym(lambda i: win_ref[i:i + tile_d, :, :, :], wD)
        # Pass 2: H (second leading dim -> free shifts).
        t2_ref[...] = _sym(lambda j: t1_ref[:, j:j + Ho, :, :], wH)
        # Pass 3: W (sublane dim), written straight into the output block.
        o_ref[...] = _sym(lambda l: t2_ref[:, :, l:l + Wo_p, :], wW).astype(o_ref.dtype)

    if halo_d:
        def kernel(x_main_ref, x_halo_ref, o_ref, win_ref, t1_ref, t2_ref):
            _body(x_main_ref, x_halo_ref, o_ref, win_ref, t1_ref, t2_ref)
    else:
        def kernel(x_main_ref, o_ref, win_ref, t1_ref, t2_ref):
            _body(x_main_ref, None, o_ref, win_ref, t1_ref, t2_ref)
    return kernel


def gaussian_smoothing_channels_last(x, kernel_size, sigma):
    """Depthwise 3D gaussian filtering on a channels-last (D, H, W, C) array.

    Keeping this layout end-to-end avoids the two full-volume HBM transposes
    of the NCDHW wrapper (the biggest end-to-end lever on HBM-bound v5e/v6e).
    """
    ks = to_3tuple(kernel_size)
    sg = to_3tuple(sigma)
    kD, kH, kW = ks
    taps_d = _gaussian_1d(kD, sg[0])   # applied along D (kernel dim ks[0])
    taps_h = _gaussian_1d(kH, sg[1])   # applied along H
    taps_w = _gaussian_1d(kW, sg[2])   # applied along W

    # NOTE: F.pad(x, (ks[0]//2,)*2 + (ks[1]//2,)*2 + (ks[2]//2,)*2) pads the
    # LAST dims first: W gets ks[0]//2, H gets ks[1]//2, D gets ks[2]//2.
    # This intentionally reproduces the PyTorch module's pad-ordering quirk;
    # do NOT "fix" it or outputs change for anisotropic kernel_size.
    # TODO(synk): one-time cross-check vs. actual torch GaussianSmoothing for
    # an anisotropic kernel_size (the JAX reference encodes the same reading).
    pad_w, pad_h, pad_d = ks[0] // 2, ks[1] // 2, ks[2] // 2

    D, H, W, NC = x.shape
    Dp, Hp, Wp = D + 2 * pad_d, H + 2 * pad_h, W + 2 * pad_w
    Do, Ho, Wo = Dp - kD + 1, Hp - kH + 1, Wp - kW + 1

    # ---- lane (channel) blocking -------------------------------------------
    # >= 128 channel lanes -> unmasked, lane-dense stores.  For small N*C the
    # up-to-16x HBM inflation of padding to 128 lanes outweighs the masked
    # vst cost on a memory-bound op, so keep the true extent (it equals the
    # full array dim, which still satisfies the (8,128) BlockSpec rule).
    if NC >= 96:
        lane_block = 128
        NCp = _round_up(NC, 128)
    else:
        lane_block = NC
        NCp = NC
    n_lane_blocks = NCp // lane_block

    # ---- sublane (W) rounding ----------------------------------------------
    # Round the output W extent up to a multiple of 8 so output / scratch
    # blocks fill whole (8,128) vreg tiles; extra zero columns are sliced off.
    Wo_p = _round_up(Wo, 8)
    extra_w = Wo_p - Wo
    Wp_p = Wp + extra_w

    # ---- D tiling with halo, sized per TPU generation ------------------------
    halo_d = kD - 1
    cap = _vmem_capacity_bytes()
    budget = int(0.6 * cap)              # headroom for Mosaic-internal temps
    tile_d = _pick_tile_d(Do, halo_d, Hp, Wp_p, Ho, Wo_p,
                          lane_block, n_lane_blocks, budget)
    n_d_tiles = _cdiv(Do, tile_d)
    d_ext = n_d_tiles * tile_d + halo_d  # all main + halo blocks stay in-bounds
    extra_d = d_ext - Dp

    # Zero-pad D/H/W (conv halo + tiling/alignment slack) and the lane dim.
    # This is one fused copy produced together with whatever op made `x`.
    # TODO(synk): fold the zero halo into the in-kernel window assembly to
    #             drop this wrapper pass for very large volumes.
    xt = jnp.pad(
        x,
        ((pad_d, pad_d + extra_d), (pad_h, pad_h),
         (pad_w, pad_w + extra_w), (0, NCp - NC)),
        mode="constant", constant_values=0)

    kernel = _make_kernel(taps_d, taps_h, taps_w, tile_d, halo_d, Ho, Wo_p)

    in_specs = [pl.BlockSpec((tile_d, Hp, Wp_p, lane_block),
                             lambda c, t: (t, 0, 0, c))]
    operands = [xt]
    if halo_d:
        halo_stride = tile_d // halo_d   # tile_d is a multiple of halo_d
        in_specs.append(
            pl.BlockSpec((halo_d, Hp, Wp_p, lane_block),
                         lambda c, t: ((t + 1) * halo_stride, 0, 0, c)))
        operands.append(xt)

    out = pl.pallas_call(
        kernel,
        out_shape=jax.ShapeDtypeStruct((n_d_tiles * tile_d, Ho, Wo_p, NCp), x.dtype),
        grid_spec=pltpu.PrefetchScalarGridSpec(
            num_scalar_prefetch=0,
            grid=(n_lane_blocks, n_d_tiles),
            in_specs=in_specs,
            out_specs=pl.BlockSpec((tile_d, Ho, Wo_p, lane_block),
                                   lambda c, t: (t, 0, 0, c)),
            scratch_shapes=[
                pltpu.VMEM((tile_d + halo_d, Hp, Wp_p, lane_block), jnp.float32),
                pltpu.VMEM((tile_d, Hp, Wp_p, lane_block), jnp.float32),
                pltpu.VMEM((tile_d, Ho, Wp_p, lane_block), jnp.float32),
            ],
        ),
        compiler_params=pltpu.CompilerParams(
            dimension_semantics=("parallel", "parallel"),
            vmem_limit_bytes=int(0.85 * cap),
        ),
    )(*operands)

    return out[:Do, :, :Wo, :NC]


def gaussian_smoothing(x, kernel_size, sigma):
    """Depthwise 3D gaussian filtering matching GaussianSmoothing.forward.

    x: (N, C, D, H, W) float array (NCDHW, same as the PyTorch module).
    """
    N, C, D, H, W = x.shape
    xt = jnp.transpose(x.reshape(N * C, D, H, W), (1, 2, 3, 0))
    out = gaussian_smoothing_channels_last(xt, kernel_size, sigma)
    Do, Ho, Wo, _ = out.shape
    return jnp.transpose(out, (3, 0, 1, 2)).reshape(N, C, Do, Ho, Wo)


def _reference(x, kernel_size, sigma):
    """Pure-JAX reference (depthwise conv3d) for correctness check."""
    ks = to_3tuple(kernel_size)
    weights = jnp.asarray(_gaussian_weights_3d(kernel_size, sigma))
    pad_w, pad_h, pad_d = ks[0] // 2, ks[1] // 2, ks[2] // 2
    xp = jnp.pad(
        x,
        ((0, 0), (0, 0), (pad_d, pad_d), (pad_h, pad_h), (pad_w, pad_w)),
    )
    C = x.shape[1]
    w = jnp.broadcast_to(weights[None, None], (C, 1) + weights.shape)
    return jax.lax.conv_general_dilated(
        xp, w,
        window_strides=(1, 1, 1),
        padding="VALID",
        feature_group_count=C,
        dimension_numbers=("NCDHW", "OIDHW", "NCDHW"),
    )


if __name__ == "__main__":
    k1, k2, k3 = jax.random.split(jax.random.PRNGKey(0), 3)

    # Case 1: isotropic kernel, small channel count (multi D-tile halo path).
    x1 = jax.random.normal(k1, (2, 4, 8, 8, 8), dtype=jnp.float32)
    out1 = jax.block_until_ready(gaussian_smoothing(x1, 3, 1.0))
    ref1 = jax.block_until_ready(_reference(x1, 3, 1.0))
    assert out1.shape == ref1.shape, (out1.shape, ref1.shape)
    np.testing.assert_allclose(np.asarray(out1), np.asarray(ref1), atol=1e-5, rtol=1e-5)

    # Case 2: anisotropic kernel (exercises the PyTorch pad-ordering quirk,
    # kD=5 halo, and the W-to-multiple-of-8 rounding).
    x2 = jax.random.normal(k2, (1, 6, 6, 10, 12), dtype=jnp.float32)
    ks2, sg2 = (5, 3, 3), (1.0, 0.8, 1.2)
    out2 = jax.block_until_ready(gaussian_smoothing(x2, ks2, sg2))
    ref2 = jax.block_until_ready(_reference(x2, ks2, sg2))
    assert out2.shape == ref2.shape, (out2.shape, ref2.shape)
    np.testing.assert_allclose(np.asarray(out2), np.asarray(ref2), atol=1e-5, rtol=1e-5)

    # Case 3: N*C >= 96 -> lane-dense 128-wide blocks + channel padding path.
    x3 = jax.random.normal(k3, (2, 96, 8, 8, 8), dtype=jnp.float32)
    out3 = jax.block_until_ready(gaussian_smoothing(x3, 3, 1.0))
    ref3 = jax.block_until_ready(_reference(x3, 3, 1.0))
    assert out3.shape == ref3.shape, (out3.shape, ref3.shape)
    np.testing.assert_allclose(np.asarray(out3), np.asarray(ref3), atol=1e-5, rtol=1e-5)

    print("KERNEL_OK")
</pallas_src>

<mosaic_0001>
module attributes {stable_mosaic.version = 11 : i64} {
  func.func @kernel(%arg0: i32, %arg1: i32, %arg2: memref<4x10x10x8xf32, #tpu.memory_space<vmem>>, %arg3: memref<2x10x10x8xf32, #tpu.memory_space<vmem>>, %arg4: memref<4x8x8x8xf32, #tpu.memory_space<vmem>>, %arg5: memref<6x10x10x8xf32, #tpu.memory_space<vmem>>, %arg6: memref<4x10x10x8xf32, #tpu.memory_space<vmem>>, %arg7: memref<4x8x10x8xf32, #tpu.memory_space<vmem>>) attributes {dimension_semantics = [#tpu.dimension_semantics<parallel>, #tpu.dimension_semantics<parallel>], iteration_bounds = array<i64: 1, 2>, scalar_prefetch = 0 : i64, scratch_operands = 3 : i64, tpu.core_type = #tpu.core_type<tc>, window_params = [{transform_indices = @transform_0, window_bounds = array<i64: 4, 10, 10, 8>}, {transform_indices = @transform_1, window_bounds = array<i64: 2, 10, 10, 8>}, {transform_indices = @transform_2, window_bounds = array<i64: 4, 8, 8, 8>}]} {
    %c0 = arith.constant 0 : index
    %c0_0 = arith.constant 0 : index
    %c0_1 = arith.constant 0 : index
    %c0_2 = arith.constant 0 : index
    %0 = vector.load %arg2[%c0, %c0_0, %c0_1, %c0_2] : memref<4x10x10x8xf32, #tpu.memory_space<vmem>>, vector<4x10x10x8xf32>
    %c0_3 = arith.constant 0 : index
    %c0_4 = arith.constant 0 : index
    %c0_5 = arith.constant 0 : index
    %c0_6 = arith.constant 0 : index
    %1 = vector.load %arg5[%c0_3, %c0_4, %c0_5, %c0_6] : memref<6x10x10x8xf32, #tpu.memory_space<vmem>>, vector<4x10x10x8xf32>
    tpu.vector_store %arg5[%c0_3, %c0_4, %c0_5, %c0_6], %0 {strides = array<i32>} : memref<6x10x10x8xf32, #tpu.memory_space<vmem>>, vector<4x10x10x8xf32>,
    %c0_7 = arith.constant 0 : index
    %c0_8 = arith.constant 0 : index
    %c0_9 = arith.constant 0 : index
    %c0_10 = arith.constant 0 : index
    %2 = vector.load %arg3[%c0_7, %c0_8, %c0_9, %c0_10] : memref<2x10x10x8xf32, #tpu.memory_space<vmem>>, vector<2x10x10x8xf32>
    %c4 = arith.constant 4 : index
    %c0_11 = arith.constant 0 : index
    %c0_12 = arith.constant 0 : index
    %c0_13 = arith.constant 0 : index
    %3 = vector.load %arg5[%c4, %c0_11, %c0_12, %c0_13] : memref<6x10x10x8xf32, #tpu.memory_space<vmem>>, vector<2x10x10x8xf32>
    tpu.vector_store %arg5[%c4, %c0_11, %c0_12, %c0_13], %2 {strides = array<i32>} : memref<6x10x10x8xf32, #tpu.memory_space<vmem>>, vector<2x10x10x8xf32>,
    %c0_14 = arith.constant 0 : index
    %c0_15 = arith.constant 0 : index
    %c0_16 = arith.constant 0 : index
    %c0_17 = arith.constant 0 : index
    %4 = vector.load %arg5[%c0_14, %c0_15, %c0_16, %c0_17] : memref<6x10x10x8xf32, #tpu.memory_space<vmem>>, vector<4x10x10x8xf32>
    %c2 = arith.constant 2 : index
    %c0_18 = arith.constant 0 : index
    %c0_19 = arith.constant 0 : index
    %c0_20 = arith.constant 0 : index
    %5 = vector.load %arg5[%c2, %c0_18, %c0_19, %c0_20] : memref<6x10x10x8xf32, #tpu.memory_space<vmem>>, vector<4x10x10x8xf32>
    %6 = arith.addf %4, %5 : vector<4x10x10x8xf32>
    %cst = arith.constant 0.274068624 : f32
    %7 = vector.broadcast %cst : f32 to vector<4x10x10x8xf32>
    %8 = arith.mulf %6, %7 : vector<4x10x10x8xf32>
    %c1 = arith.constant 1 : index
    %c0_21 = arith.constant 0 : index
    %c0_22 = arith.constant 0 : index
    %c0_23 = arith.constant 0 : index
    %9 = vector.load %arg5[%c1, %c0_21, %c0_22, %c0_23] : memref<6x10x10x8xf32, #tpu.memory_space<vmem>>, vector<4x10x10x8xf32>
    %cst_24 = arith.constant 0.451862752 : f32
    %10 = vector.broadcast %cst_24 : f32 to vector<4x10x10x8xf32>
    %11 = arith.mulf %9, %10 : vector<4x10x10x8xf32>
    %12 = arith.addf %8, %11 : vector<4x10x10x8xf32>
    %c0_25 = arith.constant 0 : index
    %c0_26 = arith.constant 0 : index
    %c0_27 = arith.constant 0 : index
    %c0_28 = arith.constant 0 : index
    %13 = vector.load %arg6[%c0_25, %c0_26, %c0_27, %c0_28] : memref<4x10x10x8xf32, #tpu.memory_space<vmem>>, vector<4x10x10x8xf32>
    tpu.vector_store %arg6[%c0_25, %c0_26, %c0_27, %c0_28], %12 {strides = array<i32>} : memref<4x10x10x8xf32, #tpu.memory_space<vmem>>, vector<4x10x10x8xf32>,
    %c0_29 = arith.constant 0 : index
    %c0_30 = arith.constant 0 : index
    %c0_31 = arith.constant 0 : index
    %c0_32 = arith.constant 0 : index
    %14 = vector.load %arg6[%c0_29, %c0_30, %c0_31, %c0_32] : memref<4x10x10x8xf32, #tpu.memory_space<vmem>>, vector<4x8x10x8xf32>
    %c0_33 = arith.constant 0 : index
    %c2_34 = arith.constant 2 : index
    %c0_35 = arith.constant 0 : index
    %c0_36 = arith.constant 0 : index
    %15 = vector.load %arg6[%c0_33, %c2_34, %c0_35, %c0_36] : memref<4x10x10x8xf32, #tpu.memory_space<vmem>>, vector<4x8x10x8xf32>
    %16 = arith.addf %14, %15 : vector<4x8x10x8xf32>
    %cst_37 = arith.constant 0.274068624 : f32
    %17 = vector.broadcast %cst_37 : f32 to vector<4x8x10x8xf32>
    %18 = arith.mulf %16, %17 : vector<4x8x10x8xf32>
    %c0_38 = arith.constant 0 : index
    %c1_39 = arith.constant 1 : index
    %c0_40 = arith.constant 0 : index
    %c0_41 = arith.constant 0 : index
    %19 = vector.load %arg6[%c0_38, %c1_39, %c0_40, %c0_41] : memref<4x10x10x8xf32, #tpu.memory_space<vmem>>, vector<4x8x10x8xf32>
    %cst_42 = arith.constant 0.451862752 : f32
    %20 = vector.broadcast %cst_42 : f32 to vector<4x8x10x8xf32>
    %21 = arith.mulf %19, %20 : vector<4x8x10x8xf32>
    %22 = arith.addf %18, %21 : vector<4x8x10x8xf32>
    %c0_43 = arith.constant 0 : index
    %c0_44 = arith.constant 0 : index
    %c0_45 = arith.constant 0 : index
    %c0_46 = arith.constant 0 : index
    %23 = vector.load %arg7[%c0_43, %c0_44, %c0_45, %c0_46] : memref<4x8x10x8xf32, #tpu.memory_space<vmem>>, vector<4x8x10x8xf32>
    tpu.vector_store %arg7[%c0_43, %c0_44, %c0_45, %c0_46], %22 {strides = array<i32>} : memref<4x8x10x8xf32, #tpu.memory_space<vmem>>, vector<4x8x10x8xf32>,
    %c0_47 = arith.constant 0 : index
    %c0_48 = arith.constant 0 : index
    %c0_49 = arith.constant 0 : index
    %c0_50 = arith.constant 0 : index
    %24 = vector.load %arg7[%c0_47, %c0_48, %c0_49, %c0_50] : memref<4x8x10x8xf32, #tpu.memory_space<vmem>>, vector<4x8x8x8xf32>
    %c0_51 = arith.constant 0 : index
    %c0_52 = arith.constant 0 : index
    %c2_53 = arith.constant 2 : index
    %c0_54 = arith.constant 0 : index
    %25 = vector.load %arg7[%c0_51, %c0_52, %c2_53, %c0_54] : memref<4x8x10x8xf32, #tpu.memory_space<vmem>>, vector<4x8x8x8xf32>
    %26 = arith.addf %24, %25 : vector<4x8x8x8xf32>
    %cst_55 = arith.constant 0.274068624 : f32
    %27 = vector.broadcast %cst_55 : f32 to vector<4x8x8x8xf32>
    %28 = arith.mulf %26, %27 : vector<4x8x8x8xf32>
    %c0_56 = arith.constant 0 : index
    %c0_57 = arith.constant 0 : index
    %c1_58 = arith.constant 1 : index
    %c0_59 = arith.constant 0 : index
    %29 = vector.load %arg7[%c0_56, %c0_57, %c1_58, %c0_59] : memref<4x8x10x8xf32, #tpu.memory_space<vmem>>, vector<4x8x8x8xf32>
    %cst_60 = arith.constant 0.451862752 : f32
    %30 = vector.broadcast %cst_60 : f32 to vector<4x8x8x8xf32>
    %31 = arith.mulf %29, %30 : vector<4x8x8x8xf32>
    %32 = arith.addf %28, %31 : vector<4x8x8x8xf32>
    %c0_61 = arith.constant 0 : index
    %c0_62 = arith.constant 0 : index
    %c0_63 = arith.constant 0 : index
    %c0_64 = arith.constant 0 : index
    %33 = vector.load %arg4[%c0_61, %c0_62, %c0_63, %c0_64] : memref<4x8x8x8xf32, #tpu.memory_space<vmem>>, vector<4x8x8x8xf32>
    tpu.vector_store %arg4[%c0_61, %c0_62, %c0_63, %c0_64], %32 {strides = array<i32>} : memref<4x8x8x8xf32, #tpu.memory_space<vmem>>, vector<4x8x8x8xf32>,
    return
  }
  func.func @transform_0(%arg0: i32, %arg1: i32) -> (i32, i32, i32, i32) {
    %c0_i32 = arith.constant 0 : i32
    %c0_i32_0 = arith.constant 0 : i32
    %c0_i32_1 = arith.constant 0 : i32
    return %arg1, %c0_i32, %c0_i32_0, %arg0 : i32, i32, i32, i32
  }
  func.func @transform_1(%arg0: i32, %arg1: i32) -> (i32, i32, i32, i32) {
    %c1_i32 = arith.constant 1 : i32
    %0 = arith.addi %arg1, %c1_i32 : i32
    %c2_i32 = arith.constant 2 : i32
    %1 = arith.muli %0, %c2_i32 : i32
    %c0_i32 = arith.constant 0 : i32
    %c0_i32_0 = arith.constant 0 : i32
    %c0_i32_1 = arith.constant 0 : i32
    return %1, %c0_i32, %c0_i32_0, %arg0 : i32, i32, i32, i32
  }
  func.func @transform_2(%arg0: i32, %arg1: i32) -> (i32, i32, i32, i32) {
    %c0_i32 = arith.constant 0 : i32
    %c0_i32_0 = arith.constant 0 : i32
    %c0_i32_1 = arith.constant 0 : i32
    return %arg1, %c0_i32, %c0_i32_0, %arg0 : i32, i32, i32, i32
  }
}

</mosaic_0001>

<llo_original>
// kernel: tpu_custom_call.1
$region0: #{tpu_custom_call.1}
  #allocation0 [shape = 'u32[]', space=smem, size = 0x4, offset = 0x4, fixed_abs, tag = 'smem constant byte address 0x4 - core index']
  #allocation1 [shape = 'u32[144,128]{1,0:T(1,128)}', space=vmem, size = 0x12000, scoped, tag = 'internal scratch']
  #allocation2 [shape = 'f32[6,10,10,8]{3,2,1,0:T(8,128)}', space=vmem, size = 0x78000, scoped, tag = 'scratch operand']
  #allocation3 [shape = 'f32[4,10,10,8]{3,2,1,0:T(8,128)}', space=vmem, size = 0x50000, scoped, tag = 'scratch operand']
  #allocation4 [shape = 'f32[4,8,10,8]{3,2,1,0:T(8,128)}', space=vmem, size = 0x40000, scoped, tag = 'scratch operand']
  %s0 = inlined_call_operand.vmem [shape: f32[10,10,10,8], index: 0, kind: input, shape index: {}]
  %s1 = inlined_call_operand.vmem [shape: f32[10,10,10,8], index: 1, kind: input, shape index: {}]
  %s2 = inlined_call_operand.hbm [shape: f32[8,8,8,8], index: 2, kind: output, shape index: {}]
  %s3 = sld [smem:[#allocation0]]
  $region41: #{tpu_custom_call.1} parent=0
    _
  %s5 = ssub.s32 1, %s3
  %s6 = scalar_select 0, %s5, %s3
  $region1: #{tpu_custom_call.1} parent=0
    #allocation5 [shape = 'u8[262144]{0}', space=vmem, size = 0x40000, scoped, tag = 'output window, operand 0']
    #allocation6 [shape = 's32[2]{0}', space=sflag, size = 0x8, scoped, tag = 'scoped memory for tpu_custom_call.1']
    %7 = vsyncpa [#allocation6], 0
    %s8 = scalar_lea.sflag [#allocation6], 1
    %9 = vsyncpa %s8, 0
    loop: start=0, step=1, limit=4
    $region2: #{tpu_custom_call.1} parent=1 // loop_pre_header
      _
    $region3: #{tpu_custom_call.1} parent=1 // loop_header
      %s11 = sphi 0, %s15
      %p12 = scmp.ge.s32.totalorder %s11, 4
      %s18 = sphi 0, %s30
      %s19 = sphi 0, %s26
      %s20 = sphi 0, %s18
      %s21 = sphi 0, %s19
      %s22 = sphi 0, %s20
      %s23 = sphi 0, %s21
      %s35 = sphi 0, %s37
      %s38 = sphi 0, %s35
      %s39 = sphi 0, %s38
      %s55 = sphi 0, %s39
      %s67 = sphi 0, %s69
      %s70 = sphi 0, %s67
      %s71 = sphi 0, %s70
      %s87 = sphi 0, %s71
      %s95 = sphi 0, %s97
      %s98 = sphi 0, %s95
      %s99 = sphi 0, %s98
      %s115 = sphi 0, %s99
    $region4: #{tpu_custom_call.1} parent=1 // loop_header_branch
      %14 = sbr.rel (%p12) target = $region8
    $region5: #{tpu_custom_call.1} parent=1 // loop_body
      %s16 = ssub.s32 %s11, 1
      %s17 = ssub.s32 %s11, 2
      %s24 = sadd.s32 1, %s19
      %p25 = scmp.ge.s32.totalorder %s24, 2
      %s26 = scalar_select %p25, 0, %s24
      %s27 = sadd.s32 1, %s18
      %s28 = scalar_select %p25, %s27, %s18
      %p29 = scmp.ge.s32.totalorder %s28, 1
      %s30 = scalar_select %p29, 0, %s28
      %s31 = ssub.s32 %s19, %s26
      %s32 = ssub.s32 %s18, %s30
      %s33 = sor.u32 %s31, %s32
      %p34 = scmp.eq.s32.totalorder %s33, 0
      %s36 = sadd.s32 %s35, 1
      %s37 = scalar_select %p34, %s35, %s36
      %p40 = pneg %p34
      %p41 = scmp.eq.s32.totalorder %s11, 1
      %p42 = por %p40, %p41
      %p43 = scmp.ne.s32.totalorder %s35, %s38
      %p44 = scmp.eq.s32.totalorder %s11, 0
      %p45 = por %p43, %p44
      %p46 = scmp.ne.s32.totalorder %s35, %s38
      %p47 = scmp.eq.s32.totalorder %s16, 1
      %p48 = por %p46, %p47
      %p49 = scmp.ne.s32.totalorder %s38, %s39
      %p50 = scmp.eq.s32.totalorder %s16, 0
      %p51 = por %p49, %p50
      %p52 = scmp.ne.s32.totalorder %s38, %s39
      %p53 = scmp.eq.s32.totalorder %s17, 1
      %p54 = por %p52, %p53
      %p56 = scmp.ne.s32.totalorder %s39, %s55
      %p57 = scmp.eq.s32.totalorder %s17, 0
      %p58 = por %p56, %p57
      %s59 = sadd.s32 %s19, 1
      %s60 = smul.u32 %s59, 2
      %s61 = sadd.s32 %s26, 1
      %s62 = smul.u32 %s61, 2
      %s63 = ssub.s32 %s60, %s62
      %s64 = ssub.s32 %s18, %s30
      %s65 = sor.u32 %s63, %s64
      %p66 = scmp.eq.s32.totalorder %s65, 0
      %s68 = sadd.s32 %s67, 1
      %s69 = scalar_select %p66, %s67, %s68
      %p72 = pneg %p66
      %p73 = scmp.eq.s32.totalorder %s11, 1
      %p74 = por %p72, %p73
      %p75 = scmp.ne.s32.totalorder %s67, %s70
      %p76 = scmp.eq.s32.totalorder %s11, 0
      %p77 = por %p75, %p76
      %p78 = scmp.ne.s32.totalorder %s67, %s70
      %p79 = scmp.eq.s32.totalorder %s16, 1
      %p80 = por %p78, %p79
      %p81 = scmp.ne.s32.totalorder %s70, %s71
      %p82 = scmp.eq.s32.totalorder %s16, 0
      %p83 = por %p81, %p82
      %p84 = scmp.ne.s32.totalorder %s70, %s71
      %p85 = scmp.eq.s32.totalorder %s17, 1
      %p86 = por %p84, %p85
      %p88 = scmp.ne.s32.totalorder %s71, %s87
      %p89 = scmp.eq.s32.totalorder %s17, 0
      %p90 = por %p88, %p89
      %s91 = ssub.s32 %s19, %s26
      %s92 = ssub.s32 %s18, %s30
      %s93 = sor.u32 %s91, %s92
      %p94 = scmp.eq.s32.totalorder %s93, 0
      %s96 = sadd.s32 %s95, 1
      %s97 = scalar_select %p94, %s95, %s96
      %p100 = pneg %p94
      %p101 = scmp.eq.s32.totalorder %s11, 1
      %p102 = por %p100, %p101
      %p103 = scmp.ne.s32.totalorder %s95, %s98
      %p104 = scmp.eq.s32.totalorder %s11, 0
      %p105 = por %p103, %p104
      %p106 = scmp.ne.s32.totalorder %s95, %s98
      %p107 = scmp.eq.s32.totalorder %s16, 1
      %p108 = por %p106, %p107
      %p109 = scmp.ne.s32.totalorder %s98, %s99
      %p110 = scmp.eq.s32.totalorder %s16, 0
      %p111 = por %p109, %p110
      %p112 = scmp.ne.s32.totalorder %s98, %s99
      %p113 = scmp.eq.s32.totalorder %s17, 1
      %p114 = por %p112, %p113
      %p116 = scmp.ne.s32.totalorder %s99, %s115
      %p117 = scmp.eq.s32.totalorder %s17, 0
      %p118 = por %p116, %p117
      %p119 = scmp.le.s32.totalorder 1, %s11
      %p120 = scmp.lt.s32.totalorder %s11, 3
      %p121 = pnand %p119, %p120
      %p122 = pneg %p121
      // Predicated region
      $region9: #{tpu_custom_call.1} parent=5 // pred_check
        _
      $region10: #{tpu_custom_call.1} parent=5 // pred_check_branch
        %124 = sbr.rel (%p121) target = $region12
      $region11: #{tpu_custom_call.1} parent=5 // pred_region
        %s125 = ssub.s32 %s11, 1
      $region12: #{tpu_custom_call.1} parent=5 // pred_fallthru
        _
      %p126 = scmp.lt.s32.totalorder %s11, 2
      // Predicated region
      $region13: #{tpu_custom_call.1} parent=5 // pred_check
        %p127 = pneg %p126
      $region14: #{tpu_custom_call.1} parent=5 // pred_check_branch
        %129 = sbr.rel (%p127) target = $region16
      $region15: #{tpu_custom_call.1} parent=5 // pred_region
        // Predicated region
        $region17: #{tpu_custom_call.1} parent=15 // pred_check
          %p130 = pneg %p45
        $region18: #{tpu_custom_call.1} parent=15 // pred_check_branch
          %132 = sbr.rel (%p130) target = $region20
        $region19: #{tpu_custom_call.1} parent=15 // pred_region
          %s133 = smul.u32 4, %s19
          %s134 = ssub.s32 10, %s133
          %p135 = scmp.lt.s32.totalorder %s134, 4
          %s136 = scalar_select %p135, %s134, 4
          %s137 = smul.u32 128, %s136
          %s138 = smul.u32 %s137, 10
          %s139 = smul.u32 %s138, 2
          %p140 = scmp.lt.s32.totalorder %s133, 9
          %s141 = scalar_select %p140, %s133, 9
          %p142 = scmp.lt.s32.totalorder %s18, 0
          %s143 = scalar_select %p142, %s18, 0
          %s144 = smul.addr %s141, 20
          %s145 = sadd.s32 %s143, %s144
          %s146 = smul.addr %s145, 8
          %s147 = scalar_lea.vmem %s0, %s146
          %s148 = smul.u32 4, %s19
          %s149 = ssub.s32 10, %s148
          %p150 = scmp.lt.s32.totalorder %s149, 4
          %s151 = scalar_select %p150, %s149, 4
          %s152 = smul.u32 128, %s151
          %s153 = smul.u32 %s152, 10
          %s154 = smul.u32 %s153, 2
        $region20: #{tpu_custom_call.1} parent=15 // pred_fallthru
          _
        // Predicated region
        $region21: #{tpu_custom_call.1} parent=15 // pred_check
          %p155 = pneg %p77
        $region22: #{tpu_custom_call.1} parent=15 // pred_check_branch
          %157 = sbr.rel (%p155) target = $region24
        $region23: #{tpu_custom_call.1} parent=15 // pred_region
          %s158 = sadd.s32 %s19, 1
          %s159 = smul.u32 %s158, 2
          %s160 = smul.u32 2, %s159
          %p161 = scmp.lt.s32.totalorder %s160, 9
          %s162 = scalar_select %p161, %s160, 9
          %p163 = scmp.lt.s32.totalorder %s18, 0
          %s164 = scalar_select %p163, %s18, 0
          %s165 = smul.addr %s162, 20
          %s166 = sadd.s32 %s164, %s165
          %s167 = smul.addr %s166, 8
          %s168 = scalar_lea.vmem %s1, %s167
          %s169 = sadd.s32 %s19, 1
          %s170 = smul.u32 %s169, 2
          %s171 = smul.u32 2, %s170
        $region24: #{tpu_custom_call.1} parent=15 // pred_fallthru
          _
      $region16: #{tpu_custom_call.1} parent=5 // pred_fallthru
        _
      %p172 = scmp.le.s32.totalorder 1, %s11
      %p173 = scmp.lt.s32.totalorder %s11, 3
      %p174 = pnand %p172, %p173
      %p175 = pneg %p174
      // Predicated region
      $region25: #{tpu_custom_call.1} parent=5 // pred_check
        _
      $region26: #{tpu_custom_call.1} parent=5 // pred_check_branch
        %177 = sbr.rel (%p174) target = $region28
      $region27: #{tpu_custom_call.1} parent=5 // pred_region
        %s178 = ssub.s32 %s11, 1
        %s179 = smul.u32 4, %s21
        %s180 = ssub.s32 10, %s179
        %p181 = scmp.lt.s32.totalorder %s180, 4
        %s182 = scalar_select %p181, %s180, 4
        %s183 = smul.u32 128, %s182
        %s184 = smul.u32 %s183, 10
        %s185 = smul.u32 %s184, 2
        %p186 = scmp.lt.s32.totalorder %s179, 9
        %s187 = scalar_select %p186, %s179, 9
        %p188 = scmp.lt.s32.totalorder %s20, 0
        %s189 = scalar_select %p188, %s20, 0
        %s190 = smul.addr %s187, 20
        %s191 = sadd.s32 %s189, %s190
        %s192 = smul.addr %s191, 8
        %s193 = scalar_lea.vmem %s0, %s192
        %p194 = pneg %p51
        %p195 = pneg %p48
        %s196 = sadd.s32 %s21, 1
        %s197 = smul.u32 %s196, 2
        %s198 = smul.u32 2, %s197
        %p199 = scmp.lt.s32.totalorder %s198, 9
        %s200 = scalar_select %p199, %s198, 9
        %p201 = scmp.lt.s32.totalorder %s20, 0
        %s202 = scalar_select %p201, %s20, 0
        %s203 = smul.addr %s200, 20
        %s204 = sadd.s32 %s202, %s203
        %s205 = smul.addr %s204, 8
        %s206 = scalar_lea.vmem %s1, %s205
        %p207 = pneg %p83
        %p208 = pneg %p80
        %p209 = pneg %p111
        %p210 = pneg %p108
        %s211 = sand.u32 %s98, 1
        %s212 = scalar_lea.sflag [#allocation6], %s211
        %s213 = sand.u32 %s98, 1
        %s214 = smul.addr %s213, 256
        %s215 = scalar_lea.vmem [#allocation5], %s214
        %s216 = smul.u32 4, %s21
        %s217 = ssub.s32 10, %s216
        %p218 = scmp.lt.s32.totalorder %s217, 4
        %s219 = scalar_select %p218, %s217, 4
        %s220 = smul.u32 128, %s219
        %s221 = smul.u32 %s220, 10
        %s222 = smul.u32 %s221, 2
        %p223 = scmp.lt.s32.totalorder %s216, 9
        %s224 = scalar_select %p223, %s216, 9
        %p225 = scmp.lt.s32.totalorder %s20, 0
        %s226 = scalar_select %p225, %s20, 0
        %s227 = smul.addr %s224, 20
        %s228 = sadd.s32 %s226, %s227
        %s229 = smul.addr %s228, 8
        %s230 = scalar_lea.vmem %s0, %s229
        %s231 = smul.u32 4, %s21
        %s232 = ssub.s32 10, %s231
        %p233 = scmp.lt.s32.totalorder %s232, 4
        %s234 = scalar_select %p233, %s232, 4
        %s235 = smul.u32 128, %s234
        %s236 = smul.u32 %s235, 10
        %s237 = smul.u32 %s236, 2
        %s238 = sadd.s32 %s21, 1
        %s239 = smul.u32 %s238, 2
        %s240 = smul.u32 2, %s239
        %p241 = scmp.lt.s32.totalorder %s240, 9
        %s242 = scalar_select %p241, %s240, 9
        %p243 = scmp.lt.s32.totalorder %s20, 0
        %s244 = scalar_select %p243, %s20, 0
        %s245 = smul.addr %s242, 20
        %s246 = sadd.s32 %s244, %s245
        %s247 = smul.addr %s246, 8
        %s248 = scalar_lea.vmem %s1, %s247
        %s249 = sadd.s32 %s21, 1
        %s250 = smul.u32 %s249, 2
        %s251 = smul.u32 2, %s250
        %s252 = smul.u32 4, %s21
        %v253 = vld [vmem:[%s230] sm:$0xff]
        %v254 = vld [vmem:[%s230 + $0x8] sm:$0x3]
        %v255 = vld [vmem:[%s230 + $0x10] sm:$0xff]
        %v256 = vld [vmem:[%s230 + $0x18] sm:$0x3]
        %v257 = vld [vmem:[%s230 + $0x20] sm:$0xff]
        %v258 = vld [vmem:[%s230 + $0x28] sm:$0x3]
        %v259 = vld [vmem:[%s230 + $0x30] sm:$0xff]
        %v260 = vld [vmem:[%s230 + $0x38] sm:$0x3]
        %v261 = vld [vmem:[%s230 + $0x40] sm:$0xff]
        %v262 = vld [vmem:[%s230 + $0x48] sm:$0x3]
        %v263 = vld [vmem:[%s230 + $0x50] sm:$0xff]
        %v264 = vld [vmem:[%s230 + $0x58] sm:$0x3]
        %v265 = vld [vmem:[%s230 + $0x60] sm:$0xff]
        %v266 = vld [vmem:[%s230 + $0x68] sm:$0x3]
        %v267 = vld [vmem:[%s230 + $0x70] sm:$0xff]
        %v268 = vld [vmem:[%s230 + $0x78] sm:$0x3]
        %v269 = vld [vmem:[%s230 + $0x80] sm:$0xff]
        %v270 = vld [vmem:[%s230 + $0x88] sm:$0x3]
        %v271 = vld [vmem:[%s230 + $0x90] sm:$0xff]
        %v272 = vld [vmem:[%s230 + $0x98] sm:$0x3]
        %v273 = vld [vmem:[%s230 + $0xa0] sm:$0xff]
        %v274 = vld [vmem:[%s230 + $0xa8] sm:$0x3]
        %v275 = vld [vmem:[%s230 + $0xb0] sm:$0xff]
        %v276 = vld [vmem:[%s230 + $0xb8] sm:$0x3]
        %v277 = vld [vmem:[%s230 + $0xc0] sm:$0xff]
        %v278 = vld [vmem:[%s230 + $0xc8] sm:$0x3]
        %v279 = vld [vmem:[%s230 + $0xd0] sm:$0xff]
        %v280 = vld [vmem:[%s230 + $0xd8] sm:$0x3]
        %v281 = vld [vmem:[%s230 + $0xe0] sm:$0xff]
        %v282 = vld [vmem:[%s230 + $0xe8] sm:$0x3]
        %v283 = vld [vmem:[%s230 + $0xf0] sm:$0xff]
        %v284 = vld [vmem:[%s230 + $0xf8] sm:$0x3]
        %v285 = vld [vmem:[%s230 + $0x100] sm:$0xff]
        %v286 = vld [vmem:[%s230 + $0x108] sm:$0x3]
        %v287 = vld [vmem:[%s230 + $0x110] sm:$0xff]
        %v288 = vld [vmem:[%s230 + $0x118] sm:$0x3]
        %v289 = vld [vmem:[%s230 + $0x120] sm:$0xff]
        %v290 = vld [vmem:[%s230 + $0x128] sm:$0x3]
        %v291 = vld [vmem:[%s230 + $0x130] sm:$0xff]
        %v292 = vld [vmem:[%s230 + $0x138] sm:$0x3]
        %v293 = vld [vmem:[%s230 + $0x140] sm:$0xff]
        %v294 = vld [vmem:[%s230 + $0x148] sm:$0x3]
        %v295 = vld [vmem:[%s230 + $0x150] sm:$0xff]
        %v296 = vld [vmem:[%s230 + $0x158] sm:$0x3]
        %v297 = vld [vmem:[%s230 + $0x160] sm:$0xff]
        %v298 = vld [vmem:[%s230 + $0x168] sm:$0x3]
        %v299 = vld [vmem:[%s230 + $0x170] sm:$0xff]
        %v300 = vld [vmem:[%s230 + $0x178] sm:$0x3]
        %v301 = vld [vmem:[%s230 + $0x180] sm:$0xff]
        %v302 = vld [vmem:[%s230 + $0x188] sm:$0x3]
        %v303 = vld [vmem:[%s230 + $0x190] sm:$0xff]
        %v304 = vld [vmem:[%s230 + $0x198] sm:$0x3]
        %v305 = vld [vmem:[%s230 + $0x1a0] sm:$0xff]
        %v306 = vld [vmem:[%s230 + $0x1a8] sm:$0x3]
        %v307 = vld [vmem:[%s230 + $0x1b0] sm:$0xff]
        %v308 = vld [vmem:[%s230 + $0x1b8] sm:$0x3]
        %v309 = vld [vmem:[%s230 + $0x1c0] sm:$0xff]
        %v310 = vld [vmem:[%s230 + $0x1c8] sm:$0x3]
        %v311 = vld [vmem:[%s230 + $0x1d0] sm:$0xff]
        %v312 = vld [vmem:[%s230 + $0x1d8] sm:$0x3]
        %v313 = vld [vmem:[%s230 + $0x1e0] sm:$0xff]
        %v314 = vld [vmem:[%s230 + $0x1e8] sm:$0x3]
        %v315 = vld [vmem:[%s230 + $0x1f0] sm:$0xff]
        %v316 = vld [vmem:[%s230 + $0x1f8] sm:$0x3]
        %v317 = vld [vmem:[%s230 + $0x200] sm:$0xff]
        %v318 = vld [vmem:[%s230 + $0x208] sm:$0x3]
        %v319 = vld [vmem:[%s230 + $0x210] sm:$0xff]
        %v320 = vld [vmem:[%s230 + $0x218] sm:$0x3]
        %v321 = vld [vmem:[%s230 + $0x220] sm:$0xff]
        %v322 = vld [vmem:[%s230 + $0x228] sm:$0x3]
        %v323 = vld [vmem:[%s230 + $0x230] sm:$0xff]
        %v324 = vld [vmem:[%s230 + $0x238] sm:$0x3]
        %v325 = vld [vmem:[%s230 + $0x240] sm:$0xff]
        %v326 = vld [vmem:[%s230 + $0x248] sm:$0x3]
        %v327 = vld [vmem:[%s230 + $0x250] sm:$0xff]
        %v328 = vld [vmem:[%s230 + $0x258] sm:$0x3]
        %v329 = vld [vmem:[%s230 + $0x260] sm:$0xff]
        %v330 = vld [vmem:[%s230 + $0x268] sm:$0x3]
        %v331 = vld [vmem:[%s230 + $0x270] sm:$0xff]
        %v332 = vld [vmem:[%s230 + $0x278] sm:$0x3]
        %vm333 = vcmask 64512
        %334 = vst.msk [vmem:[#allocation2] sm:$0xff] %vm333, %v253
        %vm335 = vcmask 58368
        %336 = vst.msk [vmem:[#allocation2 + $0x8] sm:$0x3] %vm335, %v254
        %337 = vst.msk [vmem:[#allocation2 + $0x10] sm:$0xff] %vm333, %v255
        %338 = vst.msk [vmem:[#allocation2 + $0x18] sm:$0x3] %vm335, %v256
        %339 = vst.msk [vmem:[#allocation2 + $0x20] sm:$0xff] %vm333, %v257
        %340 = vst.msk [vmem:[#allocation2 + $0x28] sm:$0x3] %vm335, %v258
        %341 = vst.msk [vmem:[#allocation2 + $0x30] sm:$0xff] %vm333, %v259
        %342 = vst.msk [vmem:[#allocation2 + $0x38] sm:$0x3] %vm335, %v260
        %343 = vst.msk [vmem:[#allocation2 + $0x40] sm:$0xff] %vm333, %v261
        %344 = vst.msk [vmem:[#allocation2 + $0x48] sm:$0x3] %vm335, %v262
        %345 = vst.msk [vmem:[#allocation2 + $0x50] sm:$0xff] %vm333, %v263
        %346 = vst.msk [vmem:[#allocation2 + $0x58] sm:$0x3] %vm335, %v264
        %347 = vst.msk [vmem:[#allocation2 + $0x60] sm:$0xff] %vm333, %v265
        %348 = vst.msk [vmem:[#allocation2 + $0x68] sm:$0x3] %vm335, %v266
        %349 = vst.msk [vmem:[#allocation2 + $0x70] sm:$0xff] %vm333, %v267
        %350 = vst.msk [vmem:[#allocation2 + $0x78] sm:$0x3] %vm335, %v268
        %351 = vst.msk [vmem:[#allocation2 + $0x80] sm:$0xff] %vm333, %v269
        %352 = vst.msk [vmem:[#allocation2 + $0x88] sm:$0x3] %vm335, %v270
        %353 = vst.msk [vmem:[#allocation2 + $0x90] sm:$0xff] %vm333, %v271
        %354 = vst.msk [vmem:[#allocation2 + $0x98] sm:$0x3] %vm335, %v272
        %355 = vst.msk [vmem:[#allocation2 + $0xa0] sm:$0xff] %vm333, %v273
        %356 = vst.msk [vmem:[#allocation2 + $0xa8] sm:$0x3] %vm335, %v274
        %357 = vst.msk [vmem:[#allocation2 + $0xb0] sm:$0xff] %vm333, %v275
        %358 = vst.msk [vmem:[#allocation2 + $0xb8] sm:$0x3] %vm335, %v276
        %359 = vst.msk [vmem:[#allocation2 + $0xc0] sm:$0xff] %vm333, %v277
        %360 = vst.msk [vmem:[#allocation2 + $0xc8] sm:$0x3] %vm335, %v278
        %361 = vst.msk [vmem:[#allocation2 + $0xd0] sm:$0xff] %vm333, %v279
        %362 = vst.msk [vmem:[#allocation2 + $0xd8] sm:$0x3] %vm335, %v280
        %363 = vst.msk [vmem:[#allocation2 + $0xe0] sm:$0xff] %vm333, %v281
        %364 = vst.msk [vmem:[#allocation2 + $0xe8] sm:$0x3] %vm335, %v282
        %365 = vst.msk [vmem:[#allocation2 + $0xf0] sm:$0xff] %vm333, %v283
        %366 = vst.msk [vmem:[#allocation2 + $0xf8] sm:$0x3] %vm335, %v284
        %367 = vst.msk [vmem:[#allocation2 + $0x100] sm:$0xff] %vm333, %v285
        %368 = vst.msk [vmem:[#allocation2 + $0x108] sm:$0x3] %vm335, %v286
        %369 = vst.msk [vmem:[#allocation2 + $0x110] sm:$0xff] %vm333, %v287
        %370 = vst.msk [vmem:[#allocation2 + $0x118] sm:$0x3] %vm335, %v288
        %371 = vst.msk [vmem:[#allocation2 + $0x120] sm:$0xff] %vm333, %v289
        %372 = vst.msk [vmem:[#allocation2 + $0x128] sm:$0x3] %vm335, %v290
        %373 = vst.msk [vmem:[#allocation2 + $0x130] sm:$0xff] %vm333, %v291
        %374 = vst.msk [vmem:[#allocation2 + $0x138] sm:$0x3] %vm335, %v292
        %375 = vst.msk [vmem:[#allocation2 + $0x140] sm:$0xff] %vm333, %v293
        %376 = vst.msk [vmem:[#allocation2 + $0x148] sm:$0x3] %vm335, %v294
        %377 = vst.msk [vmem:[#allocation2 + $0x150] sm:$0xff] %vm333, %v295
        %378 = vst.msk [vmem:[#allocation2 + $0x158] sm:$0x3] %vm335, %v296
        %379 = vst.msk [vmem:[#allocation2 + $0x160] sm:$0xff] %vm333, %v297
        %380 = vst.msk [vmem:[#allocation2 + $0x168] sm:$0x3] %vm335, %v298
        %381 = vst.msk [vmem:[#allocation2 + $0x170] sm:$0xff] %vm333, %v299
        %382 = vst.msk [vmem:[#allocation2 + $0x178] sm:$0x3] %vm335, %v300
        %383 = vst.msk [vmem:[#allocation2 + $0x180] sm:$0xff] %vm333, %v301
        %384 = vst.msk [vmem:[#allocation2 + $0x188] sm:$0x3] %vm335, %v302
        %385 = vst.msk [vmem:[#allocation2 + $0x190] sm:$0xff] %vm333, %v303
        %386 = vst.msk [vmem:[#allocation2 + $0x198] sm:$0x3] %vm335, %v304
        %387 = vst.msk [vmem:[#allocation2 + $0x1a0] sm:$0xff] %vm333, %v305
        %388 = vst.msk [vmem:[#allocation2 + $0x1a8] sm:$0x3] %vm335, %v306
        %389 = vst.msk [vmem:[#allocation2 + $0x1b0] sm:$0xff] %vm333, %v307
        %390 = vst.msk [vmem:[#allocation2 + $0x1b8] sm:$0x3] %vm335, %v308
        %391 = vst.msk [vmem:[#allocation2 + $0x1c0] sm:$0xff] %vm333, %v309
        %392 = vst.msk [vmem:[#allocation2 + $0x1c8] sm:$0x3] %vm335, %v310
        %393 = vst.msk [vmem:[#allocation2 + $0x1d0] sm:$0xff] %vm333, %v311
        %394 = vst.msk [vmem:[#allocation2 + $0x1d8] sm:$0x3] %vm335, %v312
        %395 = vst.msk [vmem:[#allocation2 + $0x1e0] sm:$0xff] %vm333, %v313
        %396 = vst.msk [vmem:[#allocation2 + $0x1e8] sm:$0x3] %vm335, %v314
        %397 = vst.msk [vmem:[#allocation2 + $0x1f0] sm:$0xff] %vm333, %v315
        %398 = vst.msk [vmem:[#allocation2 + $0x1f8] sm:$0x3] %vm335, %v316
        %399 = vst.msk [vmem:[#allocation2 + $0x200] sm:$0xff] %vm333, %v317
        %400 = vst.msk [vmem:[#allocation2 + $0x208] sm:$0x3] %vm335, %v318
        %401 = vst.msk [vmem:[#allocation2 + $0x210] sm:$0xff] %vm333, %v319
        %402 = vst.msk [vmem:[#allocation2 + $0x218] sm:$0x3] %vm335, %v320
        %403 = vst.msk [vmem:[#allocation2 + $0x220] sm:$0xff] %vm333, %v321
        %404 = vst.msk [vmem:[#allocation2 + $0x228] sm:$0x3] %vm335, %v322
        %405 = vst.msk [vmem:[#allocation2 + $0x230] sm:$0xff] %vm333, %v323
        %406 = vst.msk [vmem:[#allocation2 + $0x238] sm:$0x3] %vm335, %v324
        %407 = vst.msk [vmem:[#allocation2 + $0x240] sm:$0xff] %vm333, %v325
        %408 = vst.msk [vmem:[#allocation2 + $0x248] sm:$0x3] %vm335, %v326
        %409 = vst.msk [vmem:[#allocation2 + $0x250] sm:$0xff] %vm333, %v327
        %410 = vst.msk [vmem:[#allocation2 + $0x258] sm:$0x3] %vm335, %v328
        %411 = vst.msk [vmem:[#allocation2 + $0x260] sm:$0xff] %vm333, %v329
        %412 = vst.msk [vmem:[#allocation2 + $0x268] sm:$0x3] %vm335, %v330
        %413 = vst.msk [vmem:[#allocation2 + $0x270] sm:$0xff] %vm333, %v331
        %414 = vst.msk [vmem:[#allocation2 + $0x278] sm:$0x3] %vm335, %v332
        %v415 = vld [vmem:[%s248] sm:$0xff]
        %v416 = vld [vmem:[%s248 + $0x8] sm:$0x3]
        %v417 = vld [vmem:[%s248 + $0x10] sm:$0xff]
        %v418 = vld [vmem:[%s248 + $0x18] sm:$0x3]
        %v419 = vld [vmem:[%s248 + $0x20] sm:$0xff]
        %v420 = vld [vmem:[%s248 + $0x28] sm:$0x3]
        %v421 = vld [vmem:[%s248 + $0x30] sm:$0xff]
        %v422 = vld [vmem:[%s248 + $0x38] sm:$0x3]
        %v423 = vld [vmem:[%s248 + $0x40] sm:$0xff]
        %v424 = vld [vmem:[%s248 + $0x48] sm:$0x3]
        %v425 = vld [vmem:[%s248 + $0x50] sm:$0xff]
        %v426 = vld [vmem:[%s248 + $0x58] sm:$0x3]
        %v427 = vld [vmem:[%s248 + $0x60] sm:$0xff]
        %v428 = vld [vmem:[%s248 + $0x68] sm:$0x3]
        %v429 = vld [vmem:[%s248 + $0x70] sm:$0xff]
        %v430 = vld [vmem:[%s248 + $0x78] sm:$0x3]
        %v431 = vld [vmem:[%s248 + $0x80] sm:$0xff]
        %v432 = vld [vmem:[%s248 + $0x88] sm:$0x3]
        %v433 = vld [vmem:[%s248 + $0x90] sm:$0xff]
        %v434 = vld [vmem:[%s248 + $0x98] sm:$0x3]
        %v435 = vld [vmem:[%s248 + $0xa0] sm:$0xff]
        %v436 = vld [vmem:[%s248 + $0xa8] sm:$0x3]
        %v437 = vld [vmem:[%s248 + $0xb0] sm:$0xff]
        %v438 = vld [vmem:[%s248 + $0xb8] sm:$0x3]
        %v439 = vld [vmem:[%s248 + $0xc0] sm:$0xff]
        %v440 = vld [vmem:[%s248 + $0xc8] sm:$0x3]
        %v441 = vld [vmem:[%s248 + $0xd0] sm:$0xff]
        %v442 = vld [vmem:[%s248 + $0xd8] sm:$0x3]
        %v443 = vld [vmem:[%s248 + $0xe0] sm:$0xff]
        %v444 = vld [vmem:[%s248 + $0xe8] sm:$0x3]
        %v445 = vld [vmem:[%s248 + $0xf0] sm:$0xff]
        %v446 = vld [vmem:[%s248 + $0xf8] sm:$0x3]
        %v447 = vld [vmem:[%s248 + $0x100] sm:$0xff]
        %v448 = vld [vmem:[%s248 + $0x108] sm:$0x3]
        %v449 = vld [vmem:[%s248 + $0x110] sm:$0xff]
        %v450 = vld [vmem:[%s248 + $0x118] sm:$0x3]
        %v451 = vld [vmem:[%s248 + $0x120] sm:$0xff]
        %v452 = vld [vmem:[%s248 + $0x128] sm:$0x3]
        %v453 = vld [vmem:[%s248 + $0x130] sm:$0xff]
        %v454 = vld [vmem:[%s248 + $0x138] sm:$0x3]
        %s455 = scalar_lea.vmem [#allocation2], 640
        %456 = vst.msk [vmem:[%s455] sm:$0xff] %vm333, %v415
        %457 = vst.msk [vmem:[%s455 + $0x8] sm:$0x3] %vm335, %v416
        %458 = vst.msk [vmem:[%s455 + $0x10] sm:$0xff] %vm333, %v417
        %459 = vst.msk [vmem:[%s455 + $0x18] sm:$0x3] %vm335, %v418
        %460 = vst.msk [vmem:[%s455 + $0x20] sm:$0xff] %vm333, %v419
        %461 = vst.msk [vmem:[%s455 + $0x28] sm:$0x3] %vm335, %v420
        %462 = vst.msk [vmem:[%s455 + $0x30] sm:$0xff] %vm333, %v421
        %463 = vst.msk [vmem:[%s455 + $0x38] sm:$0x3] %vm335, %v422
        %464 = vst.msk [vmem:[%s455 + $0x40] sm:$0xff] %vm333, %v423
        %465 = vst.msk [vmem:[%s455 + $0x48] sm:$0x3] %vm335, %v424
        %466 = vst.msk [vmem:[%s455 + $0x50] sm:$0xff] %vm333, %v425
        %467 = vst.msk [vmem:[%s455 + $0x58] sm:$0x3] %vm335, %v426
        %468 = vst.msk [vmem:[%s455 + $0x60] sm:$0xff] %vm333, %v427
        %469 = vst.msk [vmem:[%s455 + $0x68] sm:$0x3] %vm335, %v428
        %470 = vst.msk [vmem:[%s455 + $0x70] sm:$0xff] %vm333, %v429
        %471 = vst.msk [vmem:[%s455 + $0x78] sm:$0x3] %vm335, %v430
        %472 = vst.msk [vmem:[%s455 + $0x80] sm:$0xff] %vm333, %v431
        %473 = vst.msk [vmem:[%s455 + $0x88] sm:$0x3] %vm335, %v432
        %474 = vst.msk [vmem:[%s455 + $0x90] sm:$0xff] %vm333, %v433
        %475 = vst.msk [vmem:[%s455 + $0x98] sm:$0x3] %vm335, %v434
        %476 = vst.msk [vmem:[%s455 + $0xa0] sm:$0xff] %vm333, %v435
        %477 = vst.msk [vmem:[%s455 + $0xa8] sm:$0x3] %vm335, %v436
        %478 = vst.msk [vmem:[%s455 + $0xb0] sm:$0xff] %vm333, %v437
        %479 = vst.msk [vmem:[%s455 + $0xb8] sm:$0x3] %vm335, %v438
        %480 = vst.msk [vmem:[%s455 + $0xc0] sm:$0xff] %vm333, %v439
        %481 = vst.msk [vmem:[%s455 + $0xc8] sm:$0x3] %vm335, %v440
        %482 = vst.msk [vmem:[%s455 + $0xd0] sm:$0xff] %vm333, %v441
        %483 = vst.msk [vmem:[%s455 + $0xd8] sm:$0x3] %vm335, %v442
        %484 = vst.msk [vmem:[%s455 + $0xe0] sm:$0xff] %vm333, %v443
        %485 = vst.msk [vmem:[%s455 + $0xe8] sm:$0x3] %vm335, %v444
        %486 = vst.msk [vmem:[%s455 + $0xf0] sm:$0xff] %vm333, %v445
        %487 = vst.msk [vmem:[%s455 + $0xf8] sm:$0x3] %vm335, %v446
        %488 = vst.msk [vmem:[%s455 + $0x100] sm:$0xff] %vm333, %v447
        %489 = vst.msk [vmem:[%s455 + $0x108] sm:$0x3] %vm335, %v448
        %490 = vst.msk [vmem:[%s455 + $0x110] sm:$0xff] %vm333, %v449
        %491 = vst.msk [vmem:[%s455 + $0x118] sm:$0x3] %vm335, %v450
        %492 = vst.msk [vmem:[%s455 + $0x120] sm:$0xff] %vm333, %v451
        %493 = vst.msk [vmem:[%s455 + $0x128] sm:$0x3] %vm335, %v452
        %494 = vst.msk [vmem:[%s455 + $0x130] sm:$0xff] %vm333, %v453
        %495 = vst.msk [vmem:[%s455 + $0x138] sm:$0x3] %vm335, %v454
        %v496 = vld [vmem:[#allocation2] sm:$0xff]
        %v497 = vld [vmem:[#allocation2 + $0x8] sm:$0x3]
        %v498 = vld [vmem:[#allocation2 + $0x10] sm:$0xff]
        %v499 = vld [vmem:[#allocation2 + $0x18] sm:$0x3]
        %v500 = vld [vmem:[#allocation2 + $0x20] sm:$0xff]
        %v501 = vld [vmem:[#allocation2 + $0x28] sm:$0x3]
        %v502 = vld [vmem:[#allocation2 + $0x30] sm:$0xff]
        %v503 = vld [vmem:[#allocation2 + $0x38] sm:$0x3]
        %v504 = vld [vmem:[#allocation2 + $0x40] sm:$0xff]
        %v505 = vld [vmem:[#allocation2 + $0x48] sm:$0x3]
        %v506 = vld [vmem:[#allocation2 + $0x50] sm:$0xff]
        %v507 = vld [vmem:[#allocation2 + $0x58] sm:$0x3]
        %v508 = vld [vmem:[#allocation2 + $0x60] sm:$0xff]
        %v509 = vld [vmem:[#allocation2 + $0x68] sm:$0x3]
        %v510 = vld [vmem:[#allocation2 + $0x70] sm:$0xff]
        %v511 = vld [vmem:[#allocation2 + $0x78] sm:$0x3]
        %v512 = vld [vmem:[#allocation2 + $0x80] sm:$0xff]
        %v513 = vld [vmem:[#allocation2 + $0x88] sm:$0x3]
        %v514 = vld [vmem:[#allocation2 + $0x90] sm:$0xff]
        %v515 = vld [vmem:[#allocation2 + $0x98] sm:$0x3]
        %v516 = vld [vmem:[#allocation2 + $0xa0] sm:$0xff]
        %v517 = vld [vmem:[#allocation2 + $0xa8] sm:$0x3]
        %v518 = vld [vmem:[#allocation2 + $0xb0] sm:$0xff]
        %v519 = vld [vmem:[#allocation2 + $0xb8] sm:$0x3]
        %v520 = vld [vmem:[#allocation2 + $0xc0] sm:$0xff]
        %v521 = vld [vmem:[#allocation2 + $0xc8] sm:$0x3]
        %v522 = vld [vmem:[#allocation2 + $0xd0] sm:$0xff]
        %v523 = vld [vmem:[#allocation2 + $0xd8] sm:$0x3]
        %v524 = vld [vmem:[#allocation2 + $0xe0] sm:$0xff]
        %v525 = vld [vmem:[#allocation2 + $0xe8] sm:$0x3]
        %v526 = vld [vmem:[#allocation2 + $0xf0] sm:$0xff]
        %v527 = vld [vmem:[#allocation2 + $0xf8] sm:$0x3]
        %v528 = vld [vmem:[#allocation2 + $0x100] sm:$0xff]
        %v529 = vld [vmem:[#allocation2 + $0x108] sm:$0x3]
        %v530 = vld [vmem:[#allocation2 + $0x110] sm:$0xff]
        %v531 = vld [vmem:[#allocation2 + $0x118] sm:$0x3]
        %v532 = vld [vmem:[#allocation2 + $0x120] sm:$0xff]
        %v533 = vld [vmem:[#allocation2 + $0x128] sm:$0x3]
        %v534 = vld [vmem:[#allocation2 + $0x130] sm:$0xff]
        %v535 = vld [vmem:[#allocation2 + $0x138] sm:$0x3]
        %v536 = vld [vmem:[#allocation2 + $0x140] sm:$0xff]
        %v537 = vld [vmem:[#allocation2 + $0x148] sm:$0x3]
        %v538 = vld [vmem:[#allocation2 + $0x150] sm:$0xff]
        %v539 = vld [vmem:[#allocation2 + $0x158] sm:$0x3]
        %v540 = vld [vmem:[#allocation2 + $0x160] sm:$0xff]
        %v541 = vld [vmem:[#allocation2 + $0x168] sm:$0x3]
        %v542 = vld [vmem:[#allocation2 + $0x170] sm:$0xff]
        %v543 = vld [vmem:[#allocation2 + $0x178] sm:$0x3]
        %v544 = vld [vmem:[#allocation2 + $0x180] sm:$0xff]
        %v545 = vld [vmem:[#allocation2 + $0x188] sm:$0x3]
        %v546 = vld [vmem:[#allocation2 + $0x190] sm:$0xff]
        %v547 = vld [vmem:[#allocation2 + $0x198] sm:$0x3]
        %v548 = vld [vmem:[#allocation2 + $0x1a0] sm:$0xff]
        %v549 = vld [vmem:[#allocation2 + $0x1a8] sm:$0x3]
        %v550 = vld [vmem:[#allocation2 + $0x1b0] sm:$0xff]
        %v551 = vld [vmem:[#allocation2 + $0x1b8] sm:$0x3]
        %v552 = vld [vmem:[#allocation2 + $0x1c0] sm:$0xff]
        %v553 = vld [vmem:[#allocation2 + $0x1c8] sm:$0x3]
        %v554 = vld [vmem:[#allocation2 + $0x1d0] sm:$0xff]
        %v555 = vld [vmem:[#allocation2 + $0x1d8] sm:$0x3]
        %v556 = vld [vmem:[#allocation2 + $0x1e0] sm:$0xff]
        %v557 = vld [vmem:[#allocation2 + $0x1e8] sm:$0x3]
        %v558 = vld [vmem:[#allocation2 + $0x1f0] sm:$0xff]
        %v559 = vld [vmem:[#allocation2 + $0x1f8] sm:$0x3]
        %v560 = vld [vmem:[#allocation2 + $0x200] sm:$0xff]
        %v561 = vld [vmem:[#allocation2 + $0x208] sm:$0x3]
        %v562 = vld [vmem:[#allocation2 + $0x210] sm:$0xff]
        %v563 = vld [vmem:[#allocation2 + $0x218] sm:$0x3]
        %v564 = vld [vmem:[#allocation2 + $0x220] sm:$0xff]
        %v565 = vld [vmem:[#allocation2 + $0x228] sm:$0x3]
        %v566 = vld [vmem:[#allocation2 + $0x230] sm:$0xff]
        %v567 = vld [vmem:[#allocation2 + $0x238] sm:$0x3]
        %v568 = vld [vmem:[#allocation2 + $0x240] sm:$0xff]
        %v569 = vld [vmem:[#allocation2 + $0x248] sm:$0x3]
        %v570 = vld [vmem:[#allocation2 + $0x250] sm:$0xff]
        %v571 = vld [vmem:[#allocation2 + $0x258] sm:$0x3]
        %v572 = vld [vmem:[#allocation2 + $0x260] sm:$0xff]
        %v573 = vld [vmem:[#allocation2 + $0x268] sm:$0x3]
        %v574 = vld [vmem:[#allocation2 + $0x270] sm:$0xff]
        %v575 = vld [vmem:[#allocation2 + $0x278] sm:$0x3]
        %s576 = scalar_lea.vmem [#allocation2], 320
        %v577 = vld [vmem:[%s576] sm:$0xff]
        %v578 = vld [vmem:[%s576 + $0x8] sm:$0x3]
        %v579 = vld [vmem:[%s576 + $0x10] sm:$0xff]
        %v580 = vld [vmem:[%s576 + $0x18] sm:$0x3]
        %v581 = vld [vmem:[%s576 + $0x20] sm:$0xff]
        %v582 = vld [vmem:[%s576 + $0x28] sm:$0x3]
        %v583 = vld [vmem:[%s576 + $0x30] sm:$0xff]
        %v584 = vld [vmem:[%s576 + $0x38] sm:$0x3]
        %v585 = vld [vmem:[%s576 + $0x40] sm:$0xff]
        %v586 = vld [vmem:[%s576 + $0x48] sm:$0x3]
        %v587 = vld [vmem:[%s576 + $0x50] sm:$0xff]
        %v588 = vld [vmem:[%s576 + $0x58] sm:$0x3]
        %v589 = vld [vmem:[%s576 + $0x60] sm:$0xff]
        %v590 = vld [vmem:[%s576 + $0x68] sm:$0x3]
        %v591 = vld [vmem:[%s576 + $0x70] sm:$0xff]
        %v592 = vld [vmem:[%s576 + $0x78] sm:$0x3]
        %v593 = vld [vmem:[%s576 + $0x80] sm:$0xff]
        %v594 = vld [vmem:[%s576 + $0x88] sm:$0x3]
        %v595 = vld [vmem:[%s576 + $0x90] sm:$0xff]
        %v596 = vld [vmem:[%s576 + $0x98] sm:$0x3]
        %v597 = vld [vmem:[%s576 + $0xa0] sm:$0xff]
        %v598 = vld [vmem:[%s576 + $0xa8] sm:$0x3]
        %v599 = vld [vmem:[%s576 + $0xb0] sm:$0xff]
        %v600 = vld [vmem:[%s576 + $0xb8] sm:$0x3]
        %v601 = vld [vmem:[%s576 + $0xc0] sm:$0xff]
        %v602 = vld [vmem:[%s576 + $0xc8] sm:$0x3]
        %v603 = vld [vmem:[%s576 + $0xd0] sm:$0xff]
        %v604 = vld [vmem:[%s576 + $0xd8] sm:$0x3]
        %v605 = vld [vmem:[%s576 + $0xe0] sm:$0xff]
        %v606 = vld [vmem:[%s576 + $0xe8] sm:$0x3]
        %v607 = vld [vmem:[%s576 + $0xf0] sm:$0xff]
        %v608 = vld [vmem:[%s576 + $0xf8] sm:$0x3]
        %v609 = vld [vmem:[%s576 + $0x100] sm:$0xff]
        %v610 = vld [vmem:[%s576 + $0x108] sm:$0x3]
        %v611 = vld [vmem:[%s576 + $0x110] sm:$0xff]
        %v612 = vld [vmem:[%s576 + $0x118] sm:$0x3]
        %v613 = vld [vmem:[%s576 + $0x120] sm:$0xff]
        %v614 = vld [vmem:[%s576 + $0x128] sm:$0x3]
        %v615 = vld [vmem:[%s576 + $0x130] sm:$0xff]
        %v616 = vld [vmem:[%s576 + $0x138] sm:$0x3]
        %v617 = vld [vmem:[%s576 + $0x140] sm:$0xff]
        %v618 = vld [vmem:[%s576 + $0x148] sm:$0x3]
        %v619 = vld [vmem:[%s576 + $0x150] sm:$0xff]
        %v620 = vld [vmem:[%s576 + $0x158] sm:$0x3]
        %v621 = vld [vmem:[%s576 + $0x160] sm:$0xff]
        %v622 = vld [vmem:[%s576 + $0x168] sm:$0x3]
        %v623 = vld [vmem:[%s576 + $0x170] sm:$0xff]
        %v624 = vld [vmem:[%s576 + $0x178] sm:$0x3]
        %v625 = vld [vmem:[%s576 + $0x180] sm:$0xff]
        %v626 = vld [vmem:[%s576 + $0x188] sm:$0x3]
        %v627 = vld [vmem:[%s576 + $0x190] sm:$0xff]
        %v628 = vld [vmem:[%s576 + $0x198] sm:$0x3]
        %v629 = vld [vmem:[%s576 + $0x1a0] sm:$0xff]
        %v630 = vld [vmem:[%s576 + $0x1a8] sm:$0x3]
        %v631 = vld [vmem:[%s576 + $0x1b0] sm:$0xff]
        %v632 = vld [vmem:[%s576 + $0x1b8] sm:$0x3]
        %v633 = vld [vmem:[%s576 + $0x1c0] sm:$0xff]
        %v634 = vld [vmem:[%s576 + $0x1c8] sm:$0x3]
        %v635 = vld [vmem:[%s576 + $0x1d0] sm:$0xff]
        %v636 = vld [vmem:[%s576 + $0x1d8] sm:$0x3]
        %v637 = vld [vmem:[%s576 + $0x1e0] sm:$0xff]
        %v638 = vld [vmem:[%s576 + $0x1e8] sm:$0x3]
        %v639 = vld [vmem:[%s576 + $0x1f0] sm:$0xff]
        %v640 = vld [vmem:[%s576 + $0x1f8] sm:$0x3]
        %v641 = vld [vmem:[%s576 + $0x200] sm:$0xff]
        %v642 = vld [vmem:[%s576 + $0x208] sm:$0x3]
        %v643 = vld [vmem:[%s576 + $0x210] sm:$0xff]
        %v644 = vld [vmem:[%s576 + $0x218] sm:$0x3]
        %v645 = vld [vmem:[%s576 + $0x220] sm:$0xff]
        %v646 = vld [vmem:[%s576 + $0x228] sm:$0x3]
        %v647 = vld [vmem:[%s576 + $0x230] sm:$0xff]
        %v648 = vld [vmem:[%s576 + $0x238] sm:$0x3]
        %v649 = vld [vmem:[%s576 + $0x240] sm:$0xff]
        %v650 = vld [vmem:[%s576 + $0x248] sm:$0x3]
        %v651 = vld [vmem:[%s576 + $0x250] sm:$0xff]
        %v652 = vld [vmem:[%s576 + $0x258] sm:$0x3]
        %v653 = vld [vmem:[%s576 + $0x260] sm:$0xff]
        %v654 = vld [vmem:[%s576 + $0x268] sm:$0x3]
        %v655 = vld [vmem:[%s576 + $0x270] sm:$0xff]
        %v656 = vld [vmem:[%s576 + $0x278] sm:$0x3]
        %v657 = vadd.f32 %v496, %v577
        %v658 = vadd.f32 %v497, %v578
        %v659 = vadd.f32 %v498, %v579
        %v660 = vadd.f32 %v499, %v580
        %v661 = vadd.f32 %v500, %v581
        %v662 = vadd.f32 %v501, %v582
        %v663 = vadd.f32 %v502, %v583
        %v664 = vadd.f32 %v503, %v584
        %v665 = vadd.f32 %v504, %v585
        %v666 = vadd.f32 %v505, %v586
        %v667 = vadd.f32 %v506, %v587
        %v668 = vadd.f32 %v507, %v588
        %v669 = vadd.f32 %v508, %v589
        %v670 = vadd.f32 %v509, %v590
        %v671 = vadd.f32 %v510, %v591
        %v672 = vadd.f32 %v511, %v592
        %v673 = vadd.f32 %v512, %v593
        %v674 = vadd.f32 %v513, %v594
        %v675 = vadd.f32 %v514, %v595
        %v676 = vadd.f32 %v515, %v596
        %v677 = vadd.f32 %v516, %v597
        %v678 = vadd.f32 %v517, %v598
        %v679 = vadd.f32 %v518, %v599
        %v680 = vadd.f32 %v519, %v600
        %v681 = vadd.f32 %v520, %v601
        %v682 = vadd.f32 %v521, %v602
        %v683 = vadd.f32 %v522, %v603
        %v684 = vadd.f32 %v523, %v604
        %v685 = vadd.f32 %v524, %v605
        %v686 = vadd.f32 %v525, %v606
        %v687 = vadd.f32 %v526, %v607
        %v688 = vadd.f32 %v527, %v608
        %v689 = vadd.f32 %v528, %v609
        %v690 = vadd.f32 %v529, %v610
        %v691 = vadd.f32 %v530, %v611
        %v692 = vadd.f32 %v531, %v612
        %v693 = vadd.f32 %v532, %v613
        %v694 = vadd.f32 %v533, %v614
        %v695 = vadd.f32 %v534, %v615
        %v696 = vadd.f32 %v535, %v616
        %v697 = vadd.f32 %v536, %v617
        %v698 = vadd.f32 %v537, %v618
        %v699 = vadd.f32 %v538, %v619
        %v700 = vadd.f32 %v539, %v620
        %v701 = vadd.f32 %v540, %v621
        %v702 = vadd.f32 %v541, %v622
        %v703 = vadd.f32 %v542, %v623
        %v704 = vadd.f32 %v543, %v624
        %v705 = vadd.f32 %v544, %v625
        %v706 = vadd.f32 %v545, %v626
        %v707 = vadd.f32 %v546, %v627
        %v708 = vadd.f32 %v547, %v628
        %v709 = vadd.f32 %v548, %v629
        %v710 = vadd.f32 %v549, %v630
        %v711 = vadd.f32 %v550, %v631
        %v712 = vadd.f32 %v551, %v632
        %v713 = vadd.f32 %v552, %v633
        %v714 = vadd.f32 %v553, %v634
        %v715 = vadd.f32 %v554, %v635
        %v716 = vadd.f32 %v555, %v636
        %v717 = vadd.f32 %v556, %v637
        %v718 = vadd.f32 %v557, %v638
        %v719 = vadd.f32 %v558, %v639
        %v720 = vadd.f32 %v559, %v640
        %v721 = vadd.f32 %v560, %v641
        %v722 = vadd.f32 %v561, %v642
        %v723 = vadd.f32 %v562, %v643
        %v724 = vadd.f32 %v563, %v644
        %v725 = vadd.f32 %v564, %v645
        %v726 = vadd.f32 %v565, %v646
        %v727 = vadd.f32 %v566, %v647
        %v728 = vadd.f32 %v567, %v648
        %v729 = vadd.f32 %v568, %v649
        %v730 = vadd.f32 %v569, %v650
        %v731 = vadd.f32 %v570, %v651
        %v732 = vadd.f32 %v571, %v652
        %v733 = vadd.f32 %v572, %v653
        %v734 = vadd.f32 %v573, %v654
        %v735 = vadd.f32 %v574, %v655
        %v736 = vadd.f32 %v575, %v656
        %v737 = vmul.f32 %v657, 0.27406862
        %v738 = vmul.f32 %v658, 0.27406862
        %v739 = vmul.f32 %v659, 0.27406862
        %v740 = vmul.f32 %v660, 0.27406862
        %v741 = vmul.f32 %v661, 0.27406862
        %v742 = vmul.f32 %v662, 0.27406862
        %v743 = vmul.f32 %v663, 0.27406862
        %v744 = vmul.f32 %v664, 0.27406862
        %v745 = vmul.f32 %v665, 0.27406862
        %v746 = vmul.f32 %v666, 0.27406862
        %v747 = vmul.f32 %v667, 0.27406862
        %v748 = vmul.f32 %v668, 0.27406862
        %v749 = vmul.f32 %v669, 0.27406862
        %v750 = vmul.f32 %v670, 0.27406862
        %v751 = vmul.f32 %v671, 0.27406862
        %v752 = vmul.f32 %v672, 0.27406862
        %v753 = vmul.f32 %v673, 0.27406862
        %v754 = vmul.f32 %v674, 0.27406862
        %v755 = vmul.f32 %v675, 0.27406862
        %v756 = vmul.f32 %v676, 0.27406862
        %v757 = vmul.f32 %v677, 0.27406862
        %v758 = vmul.f32 %v678, 0.27406862
        %v759 = vmul.f32 %v679, 0.27406862
        %v760 = vmul.f32 %v680, 0.27406862
        %v761 = vmul.f32 %v681, 0.27406862
        %v762 = vmul.f32 %v682, 0.27406862
        %v763 = vmul.f32 %v683, 0.27406862
        %v764 = vmul.f32 %v684, 0.27406862
        %v765 = vmul.f32 %v685, 0.27406862
        %v766 = vmul.f32 %v686, 0.27406862
        %v767 = vmul.f32 %v687, 0.27406862
        %v768 = vmul.f32 %v688, 0.27406862
        %v769 = vmul.f32 %v689, 0.27406862
        %v770 = vmul.f32 %v690, 0.27406862
        %v771 = vmul.f32 %v691, 0.27406862
        %v772 = vmul.f32 %v692, 0.27406862
        %v773 = vmul.f32 %v693, 0.27406862
        %v774 = vmul.f32 %v694, 0.27406862
        %v775 = vmul.f32 %v695, 0.27406862
        %v776 = vmul.f32 %v696, 0.27406862
        %v777 = vmul.f32 %v697, 0.27406862
        %v778 = vmul.f32 %v698, 0.27406862
        %v779 = vmul.f32 %v699, 0.27406862
        %v780 = vmul.f32 %v700, 0.27406862
        %v781 = vmul.f32 %v701, 0.27406862
        %v782 = vmul.f32 %v702, 0.27406862
        %v783 = vmul.f32 %v703, 0.27406862
        %v784 = vmul.f32 %v704, 0.27406862
        %v785 = vmul.f32 %v705, 0.27406862
        %v786 = vmul.f32 %v706, 0.27406862
        %v787 = vmul.f32 %v707, 0.27406862
        %v788 = vmul.f32 %v708, 0.27406862
        %v789 = vmul.f32 %v709, 0.27406862
        %v790 = vmul.f32 %v710, 0.27406862
        %v791 = vmul.f32 %v711, 0.27406862
        %v792 = vmul.f32 %v712, 0.27406862
        %v793 = vmul.f32 %v713, 0.27406862
        %v794 = vmul.f32 %v714, 0.27406862
        %v795 = vmul.f32 %v715, 0.27406862
        %v796 = vmul.f32 %v716, 0.27406862
        %v797 = vmul.f32 %v717, 0.27406862
        %v798 = vmul.f32 %v718, 0.27406862
        %v799 = vmul.f32 %v719, 0.27406862
        %v800 = vmul.f32 %v720, 0.27406862
        %v801 = vmul.f32 %v721, 0.27406862
        %v802 = vmul.f32 %v722, 0.27406862
        %v803 = vmul.f32 %v723, 0.27406862
        %v804 = vmul.f32 %v724, 0.27406862
        %v805 = vmul.f32 %v725, 0.27406862
        %v806 = vmul.f32 %v726, 0.27406862
        %v807 = vmul.f32 %v727, 0.27406862
        %v808 = vmul.f32 %v728, 0.27406862
        %v809 = vmul.f32 %v729, 0.27406862
        %v810 = vmul.f32 %v730, 0.27406862
        %v811 = vmul.f32 %v731, 0.27406862
        %v812 = vmul.f32 %v732, 0.27406862
        %v813 = vmul.f32 %v733, 0.27406862
        %v814 = vmul.f32 %v734, 0.27406862
        %v815 = vmul.f32 %v735, 0.27406862
        %v816 = vmul.f32 %v736, 0.27406862
        %s817 = scalar_lea.vmem [#allocation2], 160
        %v818 = vld [vmem:[%s817] sm:$0xff]
        %v819 = vld [vmem:[%s817 + $0x8] sm:$0x3]
        %v820 = vld [vmem:[%s817 + $0x10] sm:$0xff]
        %v821 = vld [vmem:[%s817 + $0x18] sm:$0x3]
        %v822 = vld [vmem:[%s817 + $0x20] sm:$0xff]
        %v823 = vld [vmem:[%s817 + $0x28] sm:$0x3]
        %v824 = vld [vmem:[%s817 + $0x30] sm:$0xff]
        %v825 = vld [vmem:[%s817 + $0x38] sm:$0x3]
        %v826 = vld [vmem:[%s817 + $0x40] sm:$0xff]
        %v827 = vld [vmem:[%s817 + $0x48] sm:$0x3]
        %v828 = vld [vmem:[%s817 + $0x50] sm:$0xff]
        %v829 = vld [vmem:[%s817 + $0x58] sm:$0x3]
        %v830 = vld [vmem:[%s817 + $0x60] sm:$0xff]
        %v831 = vld [vmem:[%s817 + $0x68] sm:$0x3]
        %v832 = vld [vmem:[%s817 + $0x70] sm:$0xff]
        %v833 = vld [vmem:[%s817 + $0x78] sm:$0x3]
        %v834 = vld [vmem:[%s817 + $0x80] sm:$0xff]
        %v835 = vld [vmem:[%s817 + $0x88] sm:$0x3]
        %v836 = vld [vmem:[%s817 + $0x90] sm:$0xff]
        %v837 = vld [vmem:[%s817 + $0x98] sm:$0x3]
        %v838 = vld [vmem:[%s817 + $0xa0] sm:$0xff]
        %v839 = vld [vmem:[%s817 + $0xa8] sm:$0x3]
        %v840 = vld [vmem:[%s817 + $0xb0] sm:$0xff]
        %v841 = vld [vmem:[%s817 + $0xb8] sm:$0x3]
        %v842 = vld [vmem:[%s817 + $0xc0] sm:$0xff]
        %v843 = vld [vmem:[%s817 + $0xc8] sm:$0x3]
        %v844 = vld [vmem:[%s817 + $0xd0] sm:$0xff]
        %v845 = vld [vmem:[%s817 + $0xd8] sm:$0x3]
        %v846 = vld [vmem:[%s817 + $0xe0] sm:$0xff]
        %v847 = vld [vmem:[%s817 + $0xe8] sm:$0x3]
        %v848 = vld [vmem:[%s817 + $0xf0] sm:$0xff]
        %v849 = vld [vmem:[%s817 + $0xf8] sm:$0x3]
        %v850 = vld [vmem:[%s817 + $0x100] sm:$0xff]
        %v851 = vld [vmem:[%s817 + $0x108] sm:$0x3]
        %v852 = vld [vmem:[%s817 + $0x110] sm:$0xff]
        %v853 = vld [vmem:[%s817 + $0x118] sm:$0x3]
        %v854 = vld [vmem:[%s817 + $0x120] sm:$0xff]
        %v855 = vld [vmem:[%s817 + $0x128] sm:$0x3]
        %v856 = vld [vmem:[%s817 + $0x130] sm:$0xff]
        %v857 = vld [vmem:[%s817 + $0x138] sm:$0x3]
        %v858 = vld [vmem:[%s817 + $0x140] sm:$0xff]
        %v859 = vld [vmem:[%s817 + $0x148] sm:$0x3]
        %v860 = vld [vmem:[%s817 + $0x150] sm:$0xff]
        %v861 = vld [vmem:[%s817 + $0x158] sm:$0x3]
        %v862 = vld [vmem:[%s817 + $0x160] sm:$0xff]
        %v863 = vld [vmem:[%s817 + $0x168] sm:$0x3]
        %v864 = vld [vmem:[%s817 + $0x170] sm:$0xff]
        %v865 = vld [vmem:[%s817 + $0x178] sm:$0x3]
        %v866 = vld [vmem:[%s817 + $0x180] sm:$0xff]
        %v867 = vld [vmem:[%s817 + $0x188] sm:$0x3]
        %v868 = vld [vmem:[%s817 + $0x190] sm:$0xff]
        %v869 = vld [vmem:[%s817 + $0x198] sm:$0x3]
        %v870 = vld [vmem:[%s817 + $0x1a0] sm:$0xff]
        %v871 = vld [vmem:[%s817 + $0x1a8] sm:$0x3]
        %v872 = vld [vmem:[%s817 + $0x1b0] sm:$0xff]
        %v873 = vld [vmem:[%s817 + $0x1b8] sm:$0x3]
        %v874 = vld [vmem:[%s817 + $0x1c0] sm:$0xff]
        %v875 = vld [vmem:[%s817 + $0x1c8] sm:$0x3]
        %v876 = vld [vmem:[%s817 + $0x1d0] sm:$0xff]
        %v877 = vld [vmem:[%s817 + $0x1d8] sm:$0x3]
        %v878 = vld [vmem:[%s817 + $0x1e0] sm:$0xff]
        %v879 = vld [vmem:[%s817 + $0x1e8] sm:$0x3]
        %v880 = vld [vmem:[%s817 + $0x1f0] sm:$0xff]
        %v881 = vld [vmem:[%s817 + $0x1f8] sm:$0x3]
        %v882 = vld [vmem:[%s817 + $0x200] sm:$0xff]
        %v883 = vld [vmem:[%s817 + $0x208] sm:$0x3]
        %v884 = vld [vmem:[%s817 + $0x210] sm:$0xff]
        %v885 = vld [vmem:[%s817 + $0x218] sm:$0x3]
        %v886 = vld [vmem:[%s817 + $0x220] sm:$0xff]
        %v887 = vld [vmem:[%s817 + $0x228] sm:$0x3]
        %v888 = vld [vmem:[%s817 + $0x230] sm:$0xff]
        %v889 = vld [vmem:[%s817 + $0x238] sm:$0x3]
        %v890 = vld [vmem:[%s817 + $0x240] sm:$0xff]
        %v891 = vld [vmem:[%s817 + $0x248] sm:$0x3]
        %v892 = vld [vmem:[%s817 + $0x250] sm:$0xff]
        %v893 = vld [vmem:[%s817 + $0x258] sm:$0x3]
        %v894 = vld [vmem:[%s817 + $0x260] sm:$0xff]
        %v895 = vld [vmem:[%s817 + $0x268] sm:$0x3]
        %v896 = vld [vmem:[%s817 + $0x270] sm:$0xff]
        %v897 = vld [vmem:[%s817 + $0x278] sm:$0x3]
        %v898 = vmul.f32 %v818, 0.45186275
        %v899 = vmul.f32 %v819, 0.45186275
        %v900 = vmul.f32 %v820, 0.45186275
        %v901 = vmul.f32 %v821, 0.45186275
        %v902 = vmul.f32 %v822, 0.45186275
        %v903 = vmul.f32 %v823, 0.45186275
        %v904 = vmul.f32 %v824, 0.45186275
        %v905 = vmul.f32 %v825, 0.45186275
        %v906 = vmul.f32 %v826, 0.45186275
        %v907 = vmul.f32 %v827, 0.45186275
        %v908 = vmul.f32 %v828, 0.45186275
        %v909 = vmul.f32 %v829, 0.45186275
        %v910 = vmul.f32 %v830, 0.45186275
        %v911 = vmul.f32 %v831, 0.45186275
        %v912 = vmul.f32 %v832, 0.45186275
        %v913 = vmul.f32 %v833, 0.45186275
        %v914 = vmul.f32 %v834, 0.45186275
        %v915 = vmul.f32 %v835, 0.45186275
        %v916 = vmul.f32 %v836, 0.45186275
        %v917 = vmul.f32 %v837, 0.45186275
        %v918 = vmul.f32 %v838, 0.45186275
        %v919 = vmul.f32 %v839, 0.45186275
        %v920 = vmul.f32 %v840, 0.45186275
        %v921 = vmul.f32 %v841, 0.45186275
        %v922 = vmul.f32 %v842, 0.45186275
        %v923 = vmul.f32 %v843, 0.45186275
        %v924 = vmul.f32 %v844, 0.45186275
        %v925 = vmul.f32 %v845, 0.45186275
        %v926 = vmul.f32 %v846, 0.45186275
        %v927 = vmul.f32 %v847, 0.45186275
        %v928 = vmul.f32 %v848, 0.45186275
        %v929 = vmul.f32 %v849, 0.45186275
        %v930 = vmul.f32 %v850, 0.45186275
        %v931 = vmul.f32 %v851, 0.45186275
        %v932 = vmul.f32 %v852, 0.45186275
        %v933 = vmul.f32 %v853, 0.45186275
        %v934 = vmul.f32 %v854, 0.45186275
        %v935 = vmul.f32 %v855, 0.45186275
        %v936 = vmul.f32 %v856, 0.45186275
        %v937 = vmul.f32 %v857, 0.45186275
        %v938 = vmul.f32 %v858, 0.45186275
        %v939 = vmul.f32 %v859, 0.45186275
        %v940 = vmul.f32 %v860, 0.45186275
        %v941 = vmul.f32 %v861, 0.45186275
        %v942 = vmul.f32 %v862, 0.45186275
        %v943 = vmul.f32 %v863, 0.45186275
        %v944 = vmul.f32 %v864, 0.45186275
        %v945 = vmul.f32 %v865, 0.45186275
        %v946 = vmul.f32 %v866, 0.45186275
        %v947 = vmul.f32 %v867, 0.45186275
        %v948 = vmul.f32 %v868, 0.45186275
        %v949 = vmul.f32 %v869, 0.45186275
        %v950 = vmul.f32 %v870, 0.45186275
        %v951 = vmul.f32 %v871, 0.45186275
        %v952 = vmul.f32 %v872, 0.45186275
        %v953 = vmul.f32 %v873, 0.45186275
        %v954 = vmul.f32 %v874, 0.45186275
        %v955 = vmul.f32 %v875, 0.45186275
        %v956 = vmul.f32 %v876, 0.45186275
        %v957 = vmul.f32 %v877, 0.45186275
        %v958 = vmul.f32 %v878, 0.45186275
        %v959 = vmul.f32 %v879, 0.45186275
        %v960 = vmul.f32 %v880, 0.45186275
        %v961 = vmul.f32 %v881, 0.45186275
        %v962 = vmul.f32 %v882, 0.45186275
        %v963 = vmul.f32 %v883, 0.45186275
        %v964 = vmul.f32 %v884, 0.45186275
        %v965 = vmul.f32 %v885, 0.45186275
        %v966 = vmul.f32 %v886, 0.45186275
        %v967 = vmul.f32 %v887, 0.45186275
        %v968 = vmul.f32 %v888, 0.45186275
        %v969 = vmul.f32 %v889, 0.45186275
        %v970 = vmul.f32 %v890, 0.45186275
        %v971 = vmul.f32 %v891, 0.45186275
        %v972 = vmul.f32 %v892, 0.45186275
        %v973 = vmul.f32 %v893, 0.45186275
        %v974 = vmul.f32 %v894, 0.45186275
        %v975 = vmul.f32 %v895, 0.45186275
        %v976 = vmul.f32 %v896, 0.45186275
        %v977 = vmul.f32 %v897, 0.45186275
        %v978 = vadd.f32 %v737, %v898
        %v979 = vadd.f32 %v738, %v899
        %v980 = vadd.f32 %v739, %v900
        %v981 = vadd.f32 %v740, %v901
        %v982 = vadd.f32 %v741, %v902
        %v983 = vadd.f32 %v742, %v903
        %v984 = vadd.f32 %v743, %v904
        %v985 = vadd.f32 %v744, %v905
        %v986 = vadd.f32 %v745, %v906
        %v987 = vadd.f32 %v746, %v907
        %v988 = vadd.f32 %v747, %v908
        %v989 = vadd.f32 %v748, %v909
        %v990 = vadd.f32 %v749, %v910
        %v991 = vadd.f32 %v750, %v911
        %v992 = vadd.f32 %v751, %v912
        %v993 = vadd.f32 %v752, %v913
        %v994 = vadd.f32 %v753, %v914
        %v995 = vadd.f32 %v754, %v915
        %v996 = vadd.f32 %v755, %v916
        %v997 = vadd.f32 %v756, %v917
        %v998 = vadd.f32 %v757, %v918
        %v999 = vadd.f32 %v758, %v919
        %v1000 = vadd.f32 %v759, %v920
        %v1001 = vadd.f32 %v760, %v921
        %v1002 = vadd.f32 %v761, %v922
        %v1003 = vadd.f32 %v762, %v923
        %v1004 = vadd.f32 %v763, %v924
        %v1005 = vadd.f32 %v764, %v925
        %v1006 = vadd.f32 %v765, %v926
        %v1007 = vadd.f32 %v766, %v927
        %v1008 = vadd.f32 %v767, %v928
        %v1009 = vadd.f32 %v768, %v929
        %v1010 = vadd.f32 %v769, %v930
        %v1011 = vadd.f32 %v770, %v931
        %v1012 = vadd.f32 %v771, %v932
        %v1013 = vadd.f32 %v772, %v933
        %v1014 = vadd.f32 %v773, %v934
        %v1015 = vadd.f32 %v774, %v935
        %v1016 = vadd.f32 %v775, %v936
        %v1017 = vadd.f32 %v776, %v937
        %v1018 = vadd.f32 %v777, %v938
        %v1019 = vadd.f32 %v778, %v939
        %v1020 = vadd.f32 %v779, %v940
        %v1021 = vadd.f32 %v780, %v941
        %v1022 = vadd.f32 %v781, %v942
        %v1023 = vadd.f32 %v782, %v943
        %v1024 = vadd.f32 %v783, %v944
        %v1025 = vadd.f32 %v784, %v945
        %v1026 = vadd.f32 %v785, %v946
        %v1027 = vadd.f32 %v786, %v947
        %v1028 = vadd.f32 %v787, %v948
        %v1029 = vadd.f32 %v788, %v949
        %v1030 = vadd.f32 %v789, %v950
        %v1031 = vadd.f32 %v790, %v951
        %v1032 = vadd.f32 %v791, %v952
        %v1033 = vadd.f32 %v792, %v953
        %v1034 = vadd.f32 %v793, %v954
        %v1035 = vadd.f32 %v794, %v955
        %v1036 = vadd.f32 %v795, %v956
        %v1037 = vadd.f32 %v796, %v957
        %v1038 = vadd.f32 %v797, %v958
        %v1039 = vadd.f32 %v798, %v959
        %v1040 = vadd.f32 %v799, %v960
        %v1041 = vadd.f32 %v800, %v961
        %v1042 = vadd.f32 %v801, %v962
        %v1043 = vadd.f32 %v802, %v963
        %v1044 = vadd.f32 %v803, %v964
        %v1045 = vadd.f32 %v804, %v965
        %v1046 = vadd.f32 %v805, %v966
        %v1047 = vadd.f32 %v806, %v967
        %v1048 = vadd.f32 %v807, %v968
        %v1049 = vadd.f32 %v808, %v969
        %v1050 = vadd.f32 %v809, %v970
        %v1051 = vadd.f32 %v810, %v971
        %v1052 = vadd.f32 %v811, %v972
        %v1053 = vadd.f32 %v812, %v973
        %v1054 = vadd.f32 %v813, %v974
        %v1055 = vadd.f32 %v814, %v975
        %v1056 = vadd.f32 %v815, %v976
        %v1057 = vadd.f32 %v816, %v977
        %1058 = vst.msk [vmem:[#allocation3] sm:$0xff] %vm333, %v978
        %1059 = vst.msk [vmem:[#allocation3 + $0x8] sm:$0x3] %vm335, %v979
        %1060 = vst.msk [vmem:[#allocation3 + $0x10] sm:$0xff] %vm333, %v980
        %1061 = vst.msk [vmem:[#allocation3 + $0x18] sm:$0x3] %vm335, %v981
        %1062 = vst.msk [vmem:[#allocation3 + $0x20] sm:$0xff] %vm333, %v982
        %1063 = vst.msk [vmem:[#allocation3 + $0x28] sm:$0x3] %vm335, %v983
        %1064 = vst.msk [vmem:[#allocation3 + $0x30] sm:$0xff] %vm333, %v984
        %1065 = vst.msk [vmem:[#allocation3 + $0x38] sm:$0x3] %vm335, %v985
        %1066 = vst.msk [vmem:[#allocation3 + $0x40] sm:$0xff] %vm333, %v986
        %1067 = vst.msk [vmem:[#allocation3 + $0x48] sm:$0x3] %vm335, %v987
        %1068 = vst.msk [vmem:[#allocation3 + $0x50] sm:$0xff] %vm333, %v988
        %1069 = vst.msk [vmem:[#allocation3 + $0x58] sm:$0x3] %vm335, %v989
        %1070 = vst.msk [vmem:[#allocation3 + $0x60] sm:$0xff] %vm333, %v990
        %1071 = vst.msk [vmem:[#allocation3 + $0x68] sm:$0x3] %vm335, %v991
        %1072 = vst.msk [vmem:[#allocation3 + $0x70] sm:$0xff] %vm333, %v992
        %1073 = vst.msk [vmem:[#allocation3 + $0x78] sm:$0x3] %vm335, %v993
        %1074 = vst.msk [vmem:[#allocation3 + $0x80] sm:$0xff] %vm333, %v994
        %1075 = vst.msk [vmem:[#allocation3 + $0x88] sm:$0x3] %vm335, %v995
        %1076 = vst.msk [vmem:[#allocation3 + $0x90] sm:$0xff] %vm333, %v996
        %1077 = vst.msk [vmem:[#allocation3 + $0x98] sm:$0x3] %vm335, %v997
        %1078 = vst.msk [vmem:[#allocation3 + $0xa0] sm:$0xff] %vm333, %v998
        %1079 = vst.msk [vmem:[#allocation3 + $0xa8] sm:$0x3] %vm335, %v999
        %1080 = vst.msk [vmem:[#allocation3 + $0xb0] sm:$0xff] %vm333, %v1000
        %1081 = vst.msk [vmem:[#allocation3 + $0xb8] sm:$0x3] %vm335, %v1001
        %1082 = vst.msk [vmem:[#allocation3 + $0xc0] sm:$0xff] %vm333, %v1002
        %1083 = vst.msk [vmem:[#allocation3 + $0xc8] sm:$0x3] %vm335, %v1003
        %1084 = vst.msk [vmem:[#allocation3 + $0xd0] sm:$0xff] %vm333, %v1004
        %1085 = vst.msk [vmem:[#allocation3 + $0xd8] sm:$0x3] %vm335, %v1005
        %1086 = vst.msk [vmem:[#allocation3 + $0xe0] sm:$0xff] %vm333, %v1006
        %1087 = vst.msk [vmem:[#allocation3 + $0xe8] sm:$0x3] %vm335, %v1007
        %1088 = vst.msk [vmem:[#allocation3 + $0xf0] sm:$0xff] %vm333, %v1008
        %1089 = vst.msk [vmem:[#allocation3 + $0xf8] sm:$0x3] %vm335, %v1009
        %1090 = vst.msk [vmem:[#allocation3 + $0x100] sm:$0xff] %vm333, %v1010
        %1091 = vst.msk [vmem:[#allocation3 + $0x108] sm:$0x3] %vm335, %v1011
        %1092 = vst.msk [vmem:[#allocation3 + $0x110] sm:$0xff] %vm333, %v1012
        %1093 = vst.msk [vmem:[#allocation3 + $0x118] sm:$0x3] %vm335, %v1013
        %1094 = vst.msk [vmem:[#allocation3 + $0x120] sm:$0xff] %vm333, %v1014
        %1095 = vst.msk [vmem:[#allocation3 + $0x128] sm:$0x3] %vm335, %v1015
        %1096 = vst.msk [vmem:[#allocation3 + $0x130] sm:$0xff] %vm333, %v1016
        %1097 = vst.msk [vmem:[#allocation3 + $0x138] sm:$0x3] %vm335, %v1017
        %1098 = vst.msk [vmem:[#allocation3 + $0x140] sm:$0xff] %vm333, %v1018
        %1099 = vst.msk [vmem:[#allocation3 + $0x148] sm:$0x3] %vm335, %v1019
        %1100 = vst.msk [vmem:[#allocation3 + $0x150] sm:$0xff] %vm333, %v1020
        %1101 = vst.msk [vmem:[#allocation3 + $0x158] sm:$0x3] %vm335, %v1021
        %1102 = vst.msk [vmem:[#allocation3 + $0x160] sm:$0xff] %vm333, %v1022
        %1103 = vst.msk [vmem:[#allocation3 + $0x168] sm:$0x3] %vm335, %v1023
        %1104 = vst.msk [vmem:[#allocation3 + $0x170] sm:$0xff] %vm333, %v1024
        %1105 = vst.msk [vmem:[#allocation3 + $0x178] sm:$0x3] %vm335, %v1025
        %1106 = vst.msk [vmem:[#allocation3 + $0x180] sm:$0xff] %vm333, %v1026
        %1107 = vst.msk [vmem:[#allocation3 + $0x188] sm:$0x3] %vm335, %v1027
        %1108 = vst.msk [vmem:[#allocation3 + $0x190] sm:$0xff] %vm333, %v1028
        %1109 = vst.msk [vmem:[#allocation3 + $0x198] sm:$0x3] %vm335, %v1029
        %1110 = vst.msk [vmem:[#allocation3 + $0x1a0] sm:$0xff] %vm333, %v1030
        %1111 = vst.msk [vmem:[#allocation3 + $0x1a8] sm:$0x3] %vm335, %v1031
        %1112 = vst.msk [vmem:[#allocation3 + $0x1b0] sm:$0xff] %vm333, %v1032
        %1113 = vst.msk [vmem:[#allocation3 + $0x1b8] sm:$0x3] %vm335, %v1033
        %1114 = vst.msk [vmem:[#allocation3 + $0x1c0] sm:$0xff] %vm333, %v1034
        %1115 = vst.msk [vmem:[#allocation3 + $0x1c8] sm:$0x3] %vm335, %v1035
        %1116 = vst.msk [vmem:[#allocation3 + $0x1d0] sm:$0xff] %vm333, %v1036
        %1117 = vst.msk [vmem:[#allocation3 + $0x1d8] sm:$0x3] %vm335, %v1037
        %1118 = vst.msk [vmem:[#allocation3 + $0x1e0] sm:$0xff] %vm333, %v1038
        %1119 = vst.msk [vmem:[#allocation3 + $0x1e8] sm:$0x3] %vm335, %v1039
        %1120 = vst.msk [vmem:[#allocation3 + $0x1f0] sm:$0xff] %vm333, %v1040
        %1121 = vst.msk [vmem:[#allocation3 + $0x1f8] sm:$0x3] %vm335, %v1041
        %1122 = vst.msk [vmem:[#allocation3 + $0x200] sm:$0xff] %vm333, %v1042
        %1123 = vst.msk [vmem:[#allocation3 + $0x208] sm:$0x3] %vm335, %v1043
        %1124 = vst.msk [vmem:[#allocation3 + $0x210] sm:$0xff] %vm333, %v1044
        %1125 = vst.msk [vmem:[#allocation3 + $0x218] sm:$0x3] %vm335, %v1045
        %1126 = vst.msk [vmem:[#allocation3 + $0x220] sm:$0xff] %vm333, %v1046
        %1127 = vst.msk [vmem:[#allocation3 + $0x228] sm:$0x3] %vm335, %v1047
        %1128 = vst.msk [vmem:[#allocation3 + $0x230] sm:$0xff] %vm333, %v1048
        %1129 = vst.msk [vmem:[#allocation3 + $0x238] sm:$0x3] %vm335, %v1049
        %1130 = vst.msk [vmem:[#allocation3 + $0x240] sm:$0xff] %vm333, %v1050
        %1131 = vst.msk [vmem:[#allocation3 + $0x248] sm:$0x3] %vm335, %v1051
        %1132 = vst.msk [vmem:[#allocation3 + $0x250] sm:$0xff] %vm333, %v1052
        %1133 = vst.msk [vmem:[#allocation3 + $0x258] sm:$0x3] %vm335, %v1053
        %1134 = vst.msk [vmem:[#allocation3 + $0x260] sm:$0xff] %vm333, %v1054
        %1135 = vst.msk [vmem:[#allocation3 + $0x268] sm:$0x3] %vm335, %v1055
        %1136 = vst.msk [vmem:[#allocation3 + $0x270] sm:$0xff] %vm333, %v1056
        %1137 = vst.msk [vmem:[#allocation3 + $0x278] sm:$0x3] %vm335, %v1057
        %v1138 = vld [vmem:[#allocation3] sm:$0xff]
        %v1139 = vld [vmem:[#allocation3 + $0x8] sm:$0x3]
        %v1140 = vld [vmem:[#allocation3 + $0x10] sm:$0xff]
        %v1141 = vld [vmem:[#allocation3 + $0x18] sm:$0x3]
        %v1142 = vld [vmem:[#allocation3 + $0x20] sm:$0xff]
        %v1143 = vld [vmem:[#allocation3 + $0x28] sm:$0x3]
        %v1144 = vld [vmem:[#allocation3 + $0x30] sm:$0xff]
        %v1145 = vld [vmem:[#allocation3 + $0x38] sm:$0x3]
        %v1146 = vld [vmem:[#allocation3 + $0x40] sm:$0xff]
        %v1147 = vld [vmem:[#allocation3 + $0x48] sm:$0x3]
        %v1148 = vld [vmem:[#allocation3 + $0x50] sm:$0xff]
        %v1149 = vld [vmem:[#allocation3 + $0x58] sm:$0x3]
        %v1150 = vld [vmem:[#allocation3 + $0x60] sm:$0xff]
        %v1151 = vld [vmem:[#allocation3 + $0x68] sm:$0x3]
        %v1152 = vld [vmem:[#allocation3 + $0x70] sm:$0xff]
        %v1153 = vld [vmem:[#allocation3 + $0x78] sm:$0x3]
        %v1154 = vld [vmem:[#allocation3 + $0xa0] sm:$0xff]
        %v1155 = vld [vmem:[#allocation3 + $0xa8] sm:$0x3]
        %v1156 = vld [vmem:[#allocation3 + $0xb0] sm:$0xff]
        %v1157 = vld [vmem:[#allocation3 + $0xb8] sm:$0x3]
        %v1158 = vld [vmem:[#allocation3 + $0xc0] sm:$0xff]
        %v1159 = vld [vmem:[#allocation3 + $0xc8] sm:$0x3]
        %v1160 = vld [vmem:[#allocation3 + $0xd0] sm:$0xff]
        %v1161 = vld [vmem:[#allocation3 + $0xd8] sm:$0x3]
        %v1162 = vld [vmem:[#allocation3 + $0xe0] sm:$0xff]
        %v1163 = vld [vmem:[#allocation3 + $0xe8] sm:$0x3]
        %v1164 = vld [vmem:[#allocation3 + $0xf0] sm:$0xff]
        %v1165 = vld [vmem:[#allocation3 + $0xf8] sm:$0x3]
        %v1166 = vld [vmem:[#allocation3 + $0x100] sm:$0xff]
        %v1167 = vld [vmem:[#allocation3 + $0x108] sm:$0x3]
        %v1168 = vld [vmem:[#allocation3 + $0x110] sm:$0xff]
        %v1169 = vld [vmem:[#allocation3 + $0x118] sm:$0x3]
        %v1170 = vld [vmem:[#allocation3 + $0x140] sm:$0xff]
        %v1171 = vld [vmem:[#allocation3 + $0x148] sm:$0x3]
        %v1172 = vld [vmem:[#allocation3 + $0x150] sm:$0xff]
        %v1173 = vld [vmem:[#allocation3 + $0x158] sm:$0x3]
        %v1174 = vld [vmem:[#allocation3 + $0x160] sm:$0xff]
        %v1175 = vld [vmem:[#allocation3 + $0x168] sm:$0x3]
        %v1176 = vld [vmem:[#allocation3 + $0x170] sm:$0xff]
        %v1177 = vld [vmem:[#allocation3 + $0x178] sm:$0x3]
        %v1178 = vld [vmem:[#allocation3 + $0x180] sm:$0xff]
        %v1179 = vld [vmem:[#allocation3 + $0x188] sm:$0x3]
        %v1180 = vld [vmem:[#allocation3 + $0x190] sm:$0xff]
        %v1181 = vld [vmem:[#allocation3 + $0x198] sm:$0x3]
        %v1182 = vld [vmem:[#allocation3 + $0x1a0] sm:$0xff]
        %v1183 = vld [vmem:[#allocation3 + $0x1a8] sm:$0x3]
        %v1184 = vld [vmem:[#allocation3 + $0x1b0] sm:$0xff]
        %v1185 = vld [vmem:[#allocation3 + $0x1b8] sm:$0x3]
        %v1186 = vld [vmem:[#allocation3 + $0x1e0] sm:$0xff]
        %v1187 = vld [vmem:[#allocation3 + $0x1e8] sm:$0x3]
        %v1188 = vld [vmem:[#allocation3 + $0x1f0] sm:$0xff]
        %v1189 = vld [vmem:[#allocation3 + $0x1f8] sm:$0x3]
        %v1190 = vld [vmem:[#allocation3 + $0x200] sm:$0xff]
        %v1191 = vld [vmem:[#allocation3 + $0x208] sm:$0x3]
        %v1192 = vld [vmem:[#allocation3 + $0x210] sm:$0xff]
        %v1193 = vld [vmem:[#allocation3 + $0x218] sm:$0x3]
        %v1194 = vld [vmem:[#allocation3 + $0x220] sm:$0xff]
        %v1195 = vld [vmem:[#allocation3 + $0x228] sm:$0x3]
        %v1196 = vld [vmem:[#allocation3 + $0x230] sm:$0xff]
        %v1197 = vld [vmem:[#allocation3 + $0x238] sm:$0x3]
        %v1198 = vld [vmem:[#allocation3 + $0x240] sm:$0xff]
        %v1199 = vld [vmem:[#allocation3 + $0x248] sm:$0x3]
        %v1200 = vld [vmem:[#allocation3 + $0x250] sm:$0xff]
        %v1201 = vld [vmem:[#allocation3 + $0x258] sm:$0x3]
        %s1202 = scalar_lea.vmem [#allocation3], 32
        %v1203 = vld [vmem:[%s1202] sm:$0xff]
        %v1204 = vld [vmem:[%s1202 + $0x8] sm:$0x3]
        %v1205 = vld [vmem:[%s1202 + $0x10] sm:$0xff]
        %v1206 = vld [vmem:[%s1202 + $0x18] sm:$0x3]
        %v1207 = vld [vmem:[%s1202 + $0x20] sm:$0xff]
        %v1208 = vld [vmem:[%s1202 + $0x28] sm:$0x3]
        %v1209 = vld [vmem:[%s1202 + $0x30] sm:$0xff]
        %v1210 = vld [vmem:[%s1202 + $0x38] sm:$0x3]
        %v1211 = vld [vmem:[%s1202 + $0x40] sm:$0xff]
        %v1212 = vld [vmem:[%s1202 + $0x48] sm:$0x3]
        %v1213 = vld [vmem:[%s1202 + $0x50] sm:$0xff]
        %v1214 = vld [vmem:[%s1202 + $0x58] sm:$0x3]
        %v1215 = vld [vmem:[%s1202 + $0x60] sm:$0xff]
        %v1216 = vld [vmem:[%s1202 + $0x68] sm:$0x3]
        %v1217 = vld [vmem:[%s1202 + $0x70] sm:$0xff]
        %v1218 = vld [vmem:[%s1202 + $0x78] sm:$0x3]
        %v1219 = vld [vmem:[%s1202 + $0xa0] sm:$0xff]
        %v1220 = vld [vmem:[%s1202 + $0xa8] sm:$0x3]
        %v1221 = vld [vmem:[%s1202 + $0xb0] sm:$0xff]
        %v1222 = vld [vmem:[%s1202 + $0xb8] sm:$0x3]
        %v1223 = vld [vmem:[%s1202 + $0xc0] sm:$0xff]
        %v1224 = vld [vmem:[%s1202 + $0xc8] sm:$0x3]
        %v1225 = vld [vmem:[%s1202 + $0xd0] sm:$0xff]
        %v1226 = vld [vmem:[%s1202 + $0xd8] sm:$0x3]
        %v1227 = vld [vmem:[%s1202 + $0xe0] sm:$0xff]
        %v1228 = vld [vmem:[%s1202 + $0xe8] sm:$0x3]
        %v1229 = vld [vmem:[%s1202 + $0xf0] sm:$0xff]
        %v1230 = vld [vmem:[%s1202 + $0xf8] sm:$0x3]
        %v1231 = vld [vmem:[%s1202 + $0x100] sm:$0xff]
        %v1232 = vld [vmem:[%s1202 + $0x108] sm:$0x3]
        %v1233 = vld [vmem:[%s1202 + $0x110] sm:$0xff]
        %v1234 = vld [vmem:[%s1202 + $0x118] sm:$0x3]
        %v1235 = vld [vmem:[%s1202 + $0x140] sm:$0xff]
        %v1236 = vld [vmem:[%s1202 + $0x148] sm:$0x3]
        %v1237 = vld [vmem:[%s1202 + $0x150] sm:$0xff]
        %v1238 = vld [vmem:[%s1202 + $0x158] sm:$0x3]
        %v1239 = vld [vmem:[%s1202 + $0x160] sm:$0xff]
        %v1240 = vld [vmem:[%s1202 + $0x168] sm:$0x3]
        %v1241 = vld [vmem:[%s1202 + $0x170] sm:$0xff]
        %v1242 = vld [vmem:[%s1202 + $0x178] sm:$0x3]
        %v1243 = vld [vmem:[%s1202 + $0x180] sm:$0xff]
        %v1244 = vld [vmem:[%s1202 + $0x188] sm:$0x3]
        %v1245 = vld [vmem:[%s1202 + $0x190] sm:$0xff]
        %v1246 = vld [vmem:[%s1202 + $0x198] sm:$0x3]
        %v1247 = vld [vmem:[%s1202 + $0x1a0] sm:$0xff]
        %v1248 = vld [vmem:[%s1202 + $0x1a8] sm:$0x3]
        %v1249 = vld [vmem:[%s1202 + $0x1b0] sm:$0xff]
        %v1250 = vld [vmem:[%s1202 + $0x1b8] sm:$0x3]
        %v1251 = vld [vmem:[%s1202 + $0x1e0] sm:$0xff]
        %v1252 = vld [vmem:[%s1202 + $0x1e8] sm:$0x3]
        %v1253 = vld [vmem:[%s1202 + $0x1f0] sm:$0xff]
        %v1254 = vld [vmem:[%s1202 + $0x1f8] sm:$0x3]
        %v1255 = vld [vmem:[%s1202 + $0x200] sm:$0xff]
        %v1256 = vld [vmem:[%s1202 + $0x208] sm:$0x3]
        %v1257 = vld [vmem:[%s1202 + $0x210] sm:$0xff]
        %v1258 = vld [vmem:[%s1202 + $0x218] sm:$0x3]
        %v1259 = vld [vmem:[%s1202 + $0x220] sm:$0xff]
        %v1260 = vld [vmem:[%s1202 + $0x228] sm:$0x3]
        %v1261 = vld [vmem:[%s1202 + $0x230] sm:$0xff]
        %v1262 = vld [vmem:[%s1202 + $0x238] sm:$0x3]
        %v1263 = vld [vmem:[%s1202 + $0x240] sm:$0xff]
        %v1264 = vld [vmem:[%s1202 + $0x248] sm:$0x3]
        %v1265 = vld [vmem:[%s1202 + $0x250] sm:$0xff]
        %v1266 = vld [vmem:[%s1202 + $0x258] sm:$0x3]
        %v1267 = vadd.f32 %v1138, %v1203
        %v1268 = vadd.f32 %v1139, %v1204
        %v1269 = vadd.f32 %v1140, %v1205
        %v1270 = vadd.f32 %v1141, %v1206
        %v1271 = vadd.f32 %v1142, %v1207
        %v1272 = vadd.f32 %v1143, %v1208
        %v1273 = vadd.f32 %v1144, %v1209
        %v1274 = vadd.f32 %v1145, %v1210
        %v1275 = vadd.f32 %v1146, %v1211
        %v1276 = vadd.f32 %v1147, %v1212
        %v1277 = vadd.f32 %v1148, %v1213
        %v1278 = vadd.f32 %v1149, %v1214
        %v1279 = vadd.f32 %v1150, %v1215
        %v1280 = vadd.f32 %v1151, %v1216
        %v1281 = vadd.f32 %v1152, %v1217
        %v1282 = vadd.f32 %v1153, %v1218
        %v1283 = vadd.f32 %v1154, %v1219
        %v1284 = vadd.f32 %v1155, %v1220
        %v1285 = vadd.f32 %v1156, %v1221
        %v1286 = vadd.f32 %v1157, %v1222
        %v1287 = vadd.f32 %v1158, %v1223
        %v1288 = vadd.f32 %v1159, %v1224
        %v1289 = vadd.f32 %v1160, %v1225
        %v1290 = vadd.f32 %v1161, %v1226
        %v1291 = vadd.f32 %v1162, %v1227
        %v1292 = vadd.f32 %v1163, %v1228
        %v1293 = vadd.f32 %v1164, %v1229
        %v1294 = vadd.f32 %v1165, %v1230
        %v1295 = vadd.f32 %v1166, %v1231
        %v1296 = vadd.f32 %v1167, %v1232
        %v1297 = vadd.f32 %v1168, %v1233
        %v1298 = vadd.f32 %v1169, %v1234
        %v1299 = vadd.f32 %v1170, %v1235
        %v1300 = vadd.f32 %v1171, %v1236
        %v1301 = vadd.f32 %v1172, %v1237
        %v1302 = vadd.f32 %v1173, %v1238
        %v1303 = vadd.f32 %v1174, %v1239
        %v1304 = vadd.f32 %v1175, %v1240
        %v1305 = vadd.f32 %v1176, %v1241
        %v1306 = vadd.f32 %v1177, %v1242
        %v1307 = vadd.f32 %v1178, %v1243
        %v1308 = vadd.f32 %v1179, %v1244
        %v1309 = vadd.f32 %v1180, %v1245
        %v1310 = vadd.f32 %v1181, %v1246
        %v1311 = vadd.f32 %v1182, %v1247
        %v1312 = vadd.f32 %v1183, %v1248
        %v1313 = vadd.f32 %v1184, %v1249
        %v1314 = vadd.f32 %v1185, %v1250
        %v1315 = vadd.f32 %v1186, %v1251
        %v1316 = vadd.f32 %v1187, %v1252
        %v1317 = vadd.f32 %v1188, %v1253
        %v1318 = vadd.f32 %v1189, %v1254
        %v1319 = vadd.f32 %v1190, %v1255
        %v1320 = vadd.f32 %v1191, %v1256
        %v1321 = vadd.f32 %v1192, %v1257
        %v1322 = vadd.f32 %v1193, %v1258
        %v1323 = vadd.f32 %v1194, %v1259
        %v1324 = vadd.f32 %v1195, %v1260
        %v1325 = vadd.f32 %v1196, %v1261
        %v1326 = vadd.f32 %v1197, %v1262
        %v1327 = vadd.f32 %v1198, %v1263
        %v1328 = vadd.f32 %v1199, %v1264
        %v1329 = vadd.f32 %v1200, %v1265
        %v1330 = vadd.f32 %v1201, %v1266
        %v1331 = vmul.f32 %v1267, 0.27406862
        %v1332 = vmul.f32 %v1268, 0.27406862
        %v1333 = vmul.f32 %v1269, 0.27406862
        %v1334 = vmul.f32 %v1270, 0.27406862
        %v1335 = vmul.f32 %v1271, 0.27406862
        %v1336 = vmul.f32 %v1272, 0.27406862
        %v1337 = vmul.f32 %v1273, 0.27406862
        %v1338 = vmul.f32 %v1274, 0.27406862
        %v1339 = vmul.f32 %v1275, 0.27406862
        %v1340 = vmul.f32 %v1276, 0.27406862
        %v1341 = vmul.f32 %v1277, 0.27406862
        %v1342 = vmul.f32 %v1278, 0.27406862
        %v1343 = vmul.f32 %v1279, 0.27406862
        %v1344 = vmul.f32 %v1280, 0.27406862
        %v1345 = vmul.f32 %v1281, 0.27406862
        %v1346 = vmul.f32 %v1282, 0.27406862
        %v1347 = vmul.f32 %v1283, 0.27406862
        %v1348 = vmul.f32 %v1284, 0.27406862
        %v1349 = vmul.f32 %v1285, 0.27406862
        %v1350 = vmul.f32 %v1286, 0.27406862
        %v1351 = vmul.f32 %v1287, 0.27406862
        %v1352 = vmul.f32 %v1288, 0.27406862
        %v1353 = vmul.f32 %v1289, 0.27406862
        %v1354 = vmul.f32 %v1290, 0.27406862
        %v1355 = vmul.f32 %v1291, 0.27406862
        %v1356 = vmul.f32 %v1292, 0.27406862
        %v1357 = vmul.f32 %v1293, 0.27406862
        %v1358 = vmul.f32 %v1294, 0.27406862
        %v1359 = vmul.f32 %v1295, 0.27406862
        %v1360 = vmul.f32 %v1296, 0.27406862
        %v1361 = vmul.f32 %v1297, 0.27406862
        %v1362 = vmul.f32 %v1298, 0.27406862
        %v1363 = vmul.f32 %v1299, 0.27406862
        %v1364 = vmul.f32 %v1300, 0.27406862
        %v1365 = vmul.f32 %v1301, 0.27406862
        %v1366 = vmul.f32 %v1302, 0.27406862
        %v1367 = vmul.f32 %v1303, 0.27406862
        %v1368 = vmul.f32 %v1304, 0.27406862
        %v1369 = vmul.f32 %v1305, 0.27406862
        %v1370 = vmul.f32 %v1306, 0.27406862
        %v1371 = vmul.f32 %v1307, 0.27406862
        %v1372 = vmul.f32 %v1308, 0.27406862
        %v1373 = vmul.f32 %v1309, 0.27406862
        %v1374 = vmul.f32 %v1310, 0.27406862
        %v1375 = vmul.f32 %v1311, 0.27406862
        %v1376 = vmul.f32 %v1312, 0.27406862
        %v1377 = vmul.f32 %v1313, 0.27406862
        %v1378 = vmul.f32 %v1314, 0.27406862
        %v1379 = vmul.f32 %v1315, 0.27406862
        %v1380 = vmul.f32 %v1316, 0.27406862
        %v1381 = vmul.f32 %v1317, 0.27406862
        %v1382 = vmul.f32 %v1318, 0.27406862
        %v1383 = vmul.f32 %v1319, 0.27406862
        %v1384 = vmul.f32 %v1320, 0.27406862
        %v1385 = vmul.f32 %v1321, 0.27406862
        %v1386 = vmul.f32 %v1322, 0.27406862
        %v1387 = vmul.f32 %v1323, 0.27406862
        %v1388 = vmul.f32 %v1324, 0.27406862
        %v1389 = vmul.f32 %v1325, 0.27406862
        %v1390 = vmul.f32 %v1326, 0.27406862
        %v1391 = vmul.f32 %v1327, 0.27406862
        %v1392 = vmul.f32 %v1328, 0.27406862
        %v1393 = vmul.f32 %v1329, 0.27406862
        %v1394 = vmul.f32 %v1330, 0.27406862
        %s1395 = scalar_lea.vmem [#allocation3], 16
        %v1396 = vld [vmem:[%s1395] sm:$0xff]
        %v1397 = vld [vmem:[%s1395 + $0x8] sm:$0x3]
        %v1398 = vld [vmem:[%s1395 + $0x10] sm:$0xff]
        %v1399 = vld [vmem:[%s1395 + $0x18] sm:$0x3]
        %v1400 = vld [vmem:[%s1395 + $0x20] sm:$0xff]
        %v1401 = vld [vmem:[%s1395 + $0x28] sm:$0x3]
        %v1402 = vld [vmem:[%s1395 + $0x30] sm:$0xff]
        %v1403 = vld [vmem:[%s1395 + $0x38] sm:$0x3]
        %v1404 = vld [vmem:[%s1395 + $0x40] sm:$0xff]
        %v1405 = vld [vmem:[%s1395 + $0x48] sm:$0x3]
        %v1406 = vld [vmem:[%s1395 + $0x50] sm:$0xff]
        %v1407 = vld [vmem:[%s1395 + $0x58] sm:$0x3]
        %v1408 = vld [vmem:[%s1395 + $0x60] sm:$0xff]
        %v1409 = vld [vmem:[%s1395 + $0x68] sm:$0x3]
        %v1410 = vld [vmem:[%s1395 + $0x70] sm:$0xff]
        %v1411 = vld [vmem:[%s1395 + $0x78] sm:$0x3]
        %v1412 = vld [vmem:[%s1395 + $0xa0] sm:$0xff]
        %v1413 = vld [vmem:[%s1395 + $0xa8] sm:$0x3]
        %v1414 = vld [vmem:[%s1395 + $0xb0] sm:$0xff]
        %v1415 = vld [vmem:[%s1395 + $0xb8] sm:$0x3]
        %v1416 = vld [vmem:[%s1395 + $0xc0] sm:$0xff]
        %v1417 = vld [vmem:[%s1395 + $0xc8] sm:$0x3]
        %v1418 = vld [vmem:[%s1395 + $0xd0] sm:$0xff]
        %v1419 = vld [vmem:[%s1395 + $0xd8] sm:$0x3]
        %v1420 = vld [vmem:[%s1395 + $0xe0] sm:$0xff]
        %v1421 = vld [vmem:[%s1395 + $0xe8] sm:$0x3]
        %v1422 = vld [vmem:[%s1395 + $0xf0] sm:$0xff]
        %v1423 = vld [vmem:[%s1395 + $0xf8] sm:$0x3]
        %v1424 = vld [vmem:[%s1395 + $0x100] sm:$0xff]
        %v1425 = vld [vmem:[%s1395 + $0x108] sm:$0x3]
        %v1426 = vld [vmem:[%s1395 + $0x110] sm:$0xff]
        %v1427 = vld [vmem:[%s1395 + $0x118] sm:$0x3]
        %v1428 = vld [vmem:[%s1395 + $0x140] sm:$0xff]
        %v1429 = vld [vmem:[%s1395 + $0x148] sm:$0x3]
        %v1430 = vld [vmem:[%s1395 + $0x150] sm:$0xff]
        %v1431 = vld [vmem:[%s1395 + $0x158] sm:$0x3]
        %v1432 = vld [vmem:[%s1395 + $0x160] sm:$0xff]
        %v1433 = vld [vmem:[%s1395 + $0x168] sm:$0x3]
        %v1434 = vld [vmem:[%s1395 + $0x170] sm:$0xff]
        %v1435 = vld [vmem:[%s1395 + $0x178] sm:$0x3]
        %v1436 = vld [vmem:[%s1395 + $0x180] sm:$0xff]
        %v1437 = vld [vmem:[%s1395 + $0x188] sm:$0x3]
        %v1438 = vld [vmem:[%s1395 + $0x190] sm:$0xff]
        %v1439 = vld [vmem:[%s1395 + $0x198] sm:$0x3]
        %v1440 = vld [vmem:[%s1395 + $0x1a0] sm:$0xff]
        %v1441 = vld [vmem:[%s1395 + $0x1a8] sm:$0x3]
        %v1442 = vld [vmem:[%s1395 + $0x1b0] sm:$0xff]
        %v1443 = vld [vmem:[%s1395 + $0x1b8] sm:$0x3]
        %v1444 = vld [vmem:[%s1395 + $0x1e0] sm:$0xff]
        %v1445 = vld [vmem:[%s1395 + $0x1e8] sm:$0x3]
        %v1446 = vld [vmem:[%s1395 + $0x1f0] sm:$0xff]
        %v1447 = vld [vmem:[%s1395 + $0x1f8] sm:$0x3]
        %v1448 = vld [vmem:[%s1395 + $0x200] sm:$0xff]
        %v1449 = vld [vmem:[%s1395 + $0x208] sm:$0x3]
        %v1450 = vld [vmem:[%s1395 + $0x210] sm:$0xff]
        %v1451 = vld [vmem:[%s1395 + $0x218] sm:$0x3]
        %v1452 = vld [vmem:[%s1395 + $0x220] sm:$0xff]
        %v1453 = vld [vmem:[%s1395 + $0x228] sm:$0x3]
        %v1454 = vld [vmem:[%s1395 + $0x230] sm:$0xff]
        %v1455 = vld [vmem:[%s1395 + $0x238] sm:$0x3]
        %v1456 = vld [vmem:[%s1395 + $0x240] sm:$0xff]
        %v1457 = vld [vmem:[%s1395 + $0x248] sm:$0x3]
        %v1458 = vld [vmem:[%s1395 + $0x250] sm:$0xff]
        %v1459 = vld [vmem:[%s1395 + $0x258] sm:$0x3]
        %v1460 = vmul.f32 %v1396, 0.45186275
        %v1461 = vmul.f32 %v1397, 0.45186275
        %v1462 = vmul.f32 %v1398, 0.45186275
        %v1463 = vmul.f32 %v1399, 0.45186275
        %v1464 = vmul.f32 %v1400, 0.45186275
        %v1465 = vmul.f32 %v1401, 0.45186275
        %v1466 = vmul.f32 %v1402, 0.45186275
        %v1467 = vmul.f32 %v1403, 0.45186275
        %v1468 = vmul.f32 %v1404, 0.45186275
        %v1469 = vmul.f32 %v1405, 0.45186275
        %v1470 = vmul.f32 %v1406, 0.45186275
        %v1471 = vmul.f32 %v1407, 0.45186275
        %v1472 = vmul.f32 %v1408, 0.45186275
        %v1473 = vmul.f32 %v1409, 0.45186275
        %v1474 = vmul.f32 %v1410, 0.45186275
        %v1475 = vmul.f32 %v1411, 0.45186275
        %v1476 = vmul.f32 %v1412, 0.45186275
        %v1477 = vmul.f32 %v1413, 0.45186275
        %v1478 = vmul.f32 %v1414, 0.45186275
        %v1479 = vmul.f32 %v1415, 0.45186275
        %v1480 = vmul.f32 %v1416, 0.45186275
        %v1481 = vmul.f32 %v1417, 0.45186275
        %v1482 = vmul.f32 %v1418, 0.45186275
        %v1483 = vmul.f32 %v1419, 0.45186275
        %v1484 = vmul.f32 %v1420, 0.45186275
        %v1485 = vmul.f32 %v1421, 0.45186275
        %v1486 = vmul.f32 %v1422, 0.45186275
        %v1487 = vmul.f32 %v1423, 0.45186275
        %v1488 = vmul.f32 %v1424, 0.45186275
        %v1489 = vmul.f32 %v1425, 0.45186275
        %v1490 = vmul.f32 %v1426, 0.45186275
        %v1491 = vmul.f32 %v1427, 0.45186275
        %v1492 = vmul.f32 %v1428, 0.45186275
        %v1493 = vmul.f32 %v1429, 0.45186275
        %v1494 = vmul.f32 %v1430, 0.45186275
        %v1495 = vmul.f32 %v1431, 0.45186275
        %v1496 = vmul.f32 %v1432, 0.45186275
        %v1497 = vmul.f32 %v1433, 0.45186275
        %v1498 = vmul.f32 %v1434, 0.45186275
        %v1499 = vmul.f32 %v1435, 0.45186275
        %v1500 = vmul.f32 %v1436, 0.45186275
        %v1501 = vmul.f32 %v1437, 0.45186275
        %v1502 = vmul.f32 %v1438, 0.45186275
        %v1503 = vmul.f32 %v1439, 0.45186275
        %v1504 = vmul.f32 %v1440, 0.45186275
        %v1505 = vmul.f32 %v1441, 0.45186275
        %v1506 = vmul.f32 %v1442, 0.45186275
        %v1507 = vmul.f32 %v1443, 0.45186275
        %v1508 = vmul.f32 %v1444, 0.45186275
        %v1509 = vmul.f32 %v1445, 0.45186275
        %v1510 = vmul.f32 %v1446, 0.45186275
        %v1511 = vmul.f32 %v1447, 0.45186275
        %v1512 = vmul.f32 %v1448, 0.45186275
        %v1513 = vmul.f32 %v1449, 0.45186275
        %v1514 = vmul.f32 %v1450, 0.45186275
        %v1515 = vmul.f32 %v1451, 0.45186275
        %v1516 = vmul.f32 %v1452, 0.45186275
        %v1517 = vmul.f32 %v1453, 0.45186275
        %v1518 = vmul.f32 %v1454, 0.45186275
        %v1519 = vmul.f32 %v1455, 0.45186275
        %v1520 = vmul.f32 %v1456, 0.45186275
        %v1521 = vmul.f32 %v1457, 0.45186275
        %v1522 = vmul.f32 %v1458, 0.45186275
        %v1523 = vmul.f32 %v1459, 0.45186275
        %v1524 = vadd.f32 %v1331, %v1460
        %v1525 = vadd.f32 %v1332, %v1461
        %v1526 = vadd.f32 %v1333, %v1462
        %v1527 = vadd.f32 %v1334, %v1463
        %v1528 = vadd.f32 %v1335, %v1464
        %v1529 = vadd.f32 %v1336, %v1465
        %v1530 = vadd.f32 %v1337, %v1466
        %v1531 = vadd.f32 %v1338, %v1467
        %v1532 = vadd.f32 %v1339, %v1468
        %v1533 = vadd.f32 %v1340, %v1469
        %v1534 = vadd.f32 %v1341, %v1470
        %v1535 = vadd.f32 %v1342, %v1471
        %v1536 = vadd.f32 %v1343, %v1472
        %v1537 = vadd.f32 %v1344, %v1473
        %v1538 = vadd.f32 %v1345, %v1474
        %v1539 = vadd.f32 %v1346, %v1475
        %v1540 = vadd.f32 %v1347, %v1476
        %v1541 = vadd.f32 %v1348, %v1477
        %v1542 = vadd.f32 %v1349, %v1478
        %v1543 = vadd.f32 %v1350, %v1479
        %v1544 = vadd.f32 %v1351, %v1480
        %v1545 = vadd.f32 %v1352, %v1481
        %v1546 = vadd.f32 %v1353, %v1482
        %v1547 = vadd.f32 %v1354, %v1483
        %v1548 = vadd.f32 %v1355, %v1484
        %v1549 = vadd.f32 %v1356, %v1485
        %v1550 = vadd.f32 %v1357, %v1486
        %v1551 = vadd.f32 %v1358, %v1487
        %v1552 = vadd.f32 %v1359, %v1488
        %v1553 = vadd.f32 %v1360, %v1489
        %v1554 = vadd.f32 %v1361, %v1490
        %v1555 = vadd.f32 %v1362, %v1491
        %v1556 = vadd.f32 %v1363, %v1492
        %v1557 = vadd.f32 %v1364, %v1493
        %v1558 = vadd.f32 %v1365, %v1494
        %v1559 = vadd.f32 %v1366, %v1495
        %v1560 = vadd.f32 %v1367, %v1496
        %v1561 = vadd.f32 %v1368, %v1497
        %v1562 = vadd.f32 %v1369, %v1498
        %v1563 = vadd.f32 %v1370, %v1499
        %v1564 = vadd.f32 %v1371, %v1500
        %v1565 = vadd.f32 %v1372, %v1501
        %v1566 = vadd.f32 %v1373, %v1502
        %v1567 = vadd.f32 %v1374, %v1503
        %v1568 = vadd.f32 %v1375, %v1504
        %v1569 = vadd.f32 %v1376, %v1505
        %v1570 = vadd.f32 %v1377, %v1506
        %v1571 = vadd.f32 %v1378, %v1507
        %v1572 = vadd.f32 %v1379, %v1508
        %v1573 = vadd.f32 %v1380, %v1509
        %v1574 = vadd.f32 %v1381, %v1510
        %v1575 = vadd.f32 %v1382, %v1511
        %v1576 = vadd.f32 %v1383, %v1512
        %v1577 = vadd.f32 %v1384, %v1513
        %v1578 = vadd.f32 %v1385, %v1514
        %v1579 = vadd.f32 %v1386, %v1515
        %v1580 = vadd.f32 %v1387, %v1516
        %v1581 = vadd.f32 %v1388, %v1517
        %v1582 = vadd.f32 %v1389, %v1518
        %v1583 = vadd.f32 %v1390, %v1519
        %v1584 = vadd.f32 %v1391, %v1520
        %v1585 = vadd.f32 %v1392, %v1521
        %v1586 = vadd.f32 %v1393, %v1522
        %v1587 = vadd.f32 %v1394, %v1523
        %1588 = vst.msk [vmem:[#allocation4] sm:$0xff] %vm333, %v1524
        %1589 = vst.msk [vmem:[#allocation4 + $0x8] sm:$0x3] %vm335, %v1525
        %1590 = vst.msk [vmem:[#allocation4 + $0x10] sm:$0xff] %vm333, %v1526
        %1591 = vst.msk [vmem:[#allocation4 + $0x18] sm:$0x3] %vm335, %v1527
        %1592 = vst.msk [vmem:[#allocation4 + $0x20] sm:$0xff] %vm333, %v1528
        %1593 = vst.msk [vmem:[#allocation4 + $0x28] sm:$0x3] %vm335, %v1529
        %1594 = vst.msk [vmem:[#allocation4 + $0x30] sm:$0xff] %vm333, %v1530
        %1595 = vst.msk [vmem:[#allocation4 + $0x38] sm:$0x3] %vm335, %v1531
        %1596 = vst.msk [vmem:[#allocation4 + $0x40] sm:$0xff] %vm333, %v1532
        %1597 = vst.msk [vmem:[#allocation4 + $0x48] sm:$0x3] %vm335, %v1533
        %1598 = vst.msk [vmem:[#allocation4 + $0x50] sm:$0xff] %vm333, %v1534
        %1599 = vst.msk [vmem:[#allocation4 + $0x58] sm:$0x3] %vm335, %v1535
        %1600 = vst.msk [vmem:[#allocation4 + $0x60] sm:$0xff] %vm333, %v1536
        %1601 = vst.msk [vmem:[#allocation4 + $0x68] sm:$0x3] %vm335, %v1537
        %1602 = vst.msk [vmem:[#allocation4 + $0x70] sm:$0xff] %vm333, %v1538
        %1603 = vst.msk [vmem:[#allocation4 + $0x78] sm:$0x3] %vm335, %v1539
        %1604 = vst.msk [vmem:[#allocation4 + $0x80] sm:$0xff] %vm333, %v1540
        %1605 = vst.msk [vmem:[#allocation4 + $0x88] sm:$0x3] %vm335, %v1541
        %1606 = vst.msk [vmem:[#allocation4 + $0x90] sm:$0xff] %vm333, %v1542
        %1607 = vst.msk [vmem:[#allocation4 + $0x98] sm:$0x3] %vm335, %v1543
        %1608 = vst.msk [vmem:[#allocation4 + $0xa0] sm:$0xff] %vm333, %v1544
        %1609 = vst.msk [vmem:[#allocation4 + $0xa8] sm:$0x3] %vm335, %v1545
        %1610 = vst.msk [vmem:[#allocation4 + $0xb0] sm:$0xff] %vm333, %v1546
        %1611 = vst.msk [vmem:[#allocation4 + $0xb8] sm:$0x3] %vm335, %v1547
        %1612 = vst.msk [vmem:[#allocation4 + $0xc0] sm:$0xff] %vm333, %v1548
        %1613 = vst.msk [vmem:[#allocation4 + $0xc8] sm:$0x3] %vm335, %v1549
        %1614 = vst.msk [vmem:[#allocation4 + $0xd0] sm:$0xff] %vm333, %v1550
        %1615 = vst.msk [vmem:[#allocation4 + $0xd8] sm:$0x3] %vm335, %v1551
        %1616 = vst.msk [vmem:[#allocation4 + $0xe0] sm:$0xff] %vm333, %v1552
        %1617 = vst.msk [vmem:[#allocation4 + $0xe8] sm:$0x3] %vm335, %v1553
        %1618 = vst.msk [vmem:[#allocation4 + $0xf0] sm:$0xff] %vm333, %v1554
        %1619 = vst.msk [vmem:[#allocation4 + $0xf8] sm:$0x3] %vm335, %v1555
        %1620 = vst.msk [vmem:[#allocation4 + $0x100] sm:$0xff] %vm333, %v1556
        %1621 = vst.msk [vmem:[#allocation4 + $0x108] sm:$0x3] %vm335, %v1557
        %1622 = vst.msk [vmem:[#allocation4 + $0x110] sm:$0xff] %vm333, %v1558
        %1623 = vst.msk [vmem:[#allocation4 + $0x118] sm:$0x3] %vm335, %v1559
        %1624 = vst.msk [vmem:[#allocation4 + $0x120] sm:$0xff] %vm333, %v1560
        %1625 = vst.msk [vmem:[#allocation4 + $0x128] sm:$0x3] %vm335, %v1561
        %1626 = vst.msk [vmem:[#allocation4 + $0x130] sm:$0xff] %vm333, %v1562
        %1627 = vst.msk [vmem:[#allocation4 + $0x138] sm:$0x3] %vm335, %v1563
        %1628 = vst.msk [vmem:[#allocation4 + $0x140] sm:$0xff] %vm333, %v1564
        %1629 = vst.msk [vmem:[#allocation4 + $0x148] sm:$0x3] %vm335, %v1565
        %1630 = vst.msk [vmem:[#allocation4 + $0x150] sm:$0xff] %vm333, %v1566
        %1631 = vst.msk [vmem:[#allocation4 + $0x158] sm:$0x3] %vm335, %v1567
        %1632 = vst.msk [vmem:[#allocation4 + $0x160] sm:$0xff] %vm333, %v1568
        %1633 = vst.msk [vmem:[#allocation4 + $0x168] sm:$0x3] %vm335, %v1569
        %1634 = vst.msk [vmem:[#allocation4 + $0x170] sm:$0xff] %vm333, %v1570
        %1635 = vst.msk [vmem:[#allocation4 + $0x178] sm:$0x3] %vm335, %v1571
        %1636 = vst.msk [vmem:[#allocation4 + $0x180] sm:$0xff] %vm333, %v1572
        %1637 = vst.msk [vmem:[#allocation4 + $0x188] sm:$0x3] %vm335, %v1573
        %1638 = vst.msk [vmem:[#allocation4 + $0x190] sm:$0xff] %vm333, %v1574
        %1639 = vst.msk [vmem:[#allocation4 + $0x198] sm:$0x3] %vm335, %v1575
        %1640 = vst.msk [vmem:[#allocation4 + $0x1a0] sm:$0xff] %vm333, %v1576
        %1641 = vst.msk [vmem:[#allocation4 + $0x1a8] sm:$0x3] %vm335, %v1577
        %1642 = vst.msk [vmem:[#allocation4 + $0x1b0] sm:$0xff] %vm333, %v1578
        %1643 = vst.msk [vmem:[#allocation4 + $0x1b8] sm:$0x3] %vm335, %v1579
        %1644 = vst.msk [vmem:[#allocation4 + $0x1c0] sm:$0xff] %vm333, %v1580
        %1645 = vst.msk [vmem:[#allocation4 + $0x1c8] sm:$0x3] %vm335, %v1581
        %1646 = vst.msk [vmem:[#allocation4 + $0x1d0] sm:$0xff] %vm333, %v1582
        %1647 = vst.msk [vmem:[#allocation4 + $0x1d8] sm:$0x3] %vm335, %v1583
        %1648 = vst.msk [vmem:[#allocation4 + $0x1e0] sm:$0xff] %vm333, %v1584
        %1649 = vst.msk [vmem:[#allocation4 + $0x1e8] sm:$0x3] %vm335, %v1585
        %1650 = vst.msk [vmem:[#allocation4 + $0x1f0] sm:$0xff] %vm333, %v1586
        %1651 = vst.msk [vmem:[#allocation4 + $0x1f8] sm:$0x3] %vm335, %v1587
        %v1652 = vld [vmem:[#allocation4] sm:$0xff]
        %v1653 = vld [vmem:[#allocation4 + $0x10] sm:$0xff]
        %v1654 = vld [vmem:[#allocation4 + $0x20] sm:$0xff]
        %v1655 = vld [vmem:[#allocation4 + $0x30] sm:$0xff]
        %v1656 = vld [vmem:[#allocation4 + $0x40] sm:$0xff]
        %v1657 = vld [vmem:[#allocation4 + $0x50] sm:$0xff]
        %v1658 = vld [vmem:[#allocation4 + $0x60] sm:$0xff]
        %v1659 = vld [vmem:[#allocation4 + $0x70] sm:$0xff]
        %v1660 = vld [vmem:[#allocation4 + $0x80] sm:$0xff]
        %v1661 = vld [vmem:[#allocation4 + $0x90] sm:$0xff]
        %v1662 = vld [vmem:[#allocation4 + $0xa0] sm:$0xff]
        %v1663 = vld [vmem:[#allocation4 + $0xb0] sm:$0xff]
        %v1664 = vld [vmem:[#allocation4 + $0xc0] sm:$0xff]
        %v1665 = vld [vmem:[#allocation4 + $0xd0] sm:$0xff]
        %v1666 = vld [vmem:[#allocation4 + $0xe0] sm:$0xff]
        %v1667 = vld [vmem:[#allocation4 + $0xf0] sm:$0xff]
        %v1668 = vld [vmem:[#allocation4 + $0x100] sm:$0xff]
        %v1669 = vld [vmem:[#allocation4 + $0x110] sm:$0xff]
        %v1670 = vld [vmem:[#allocation4 + $0x120] sm:$0xff]
        %v1671 = vld [vmem:[#allocation4 + $0x130] sm:$0xff]
        %v1672 = vld [vmem:[#allocation4 + $0x140] sm:$0xff]
        %v1673 = vld [vmem:[#allocation4 + $0x150] sm:$0xff]
        %v1674 = vld [vmem:[#allocation4 + $0x160] sm:$0xff]
        %v1675 = vld [vmem:[#allocation4 + $0x170] sm:$0xff]
        %v1676 = vld [vmem:[#allocation4 + $0x180] sm:$0xff]
        %v1677 = vld [vmem:[#allocation4 + $0x190] sm:$0xff]
        %v1678 = vld [vmem:[#allocation4 + $0x1a0] sm:$0xff]
        %v1679 = vld [vmem:[#allocation4 + $0x1b0] sm:$0xff]
        %v1680 = vld [vmem:[#allocation4 + $0x1c0] sm:$0xff]
        %v1681 = vld [vmem:[#allocation4 + $0x1d0] sm:$0xff]
        %v1682 = vld [vmem:[#allocation4 + $0x1e0] sm:$0xff]
        %v1683 = vld [vmem:[#allocation4 + $0x1f0] sm:$0xff]
        %v1684 = vld [vmem:[#allocation4 + $0x2] sm:$0xff]
        %v1685 = vld [vmem:[#allocation4 + $0x12] sm:$0xff]
        %v1686 = vld [vmem:[#allocation4 + $0x22] sm:$0xff]
        %v1687 = vld [vmem:[#allocation4 + $0x32] sm:$0xff]
        %v1688 = vld [vmem:[#allocation4 + $0x42] sm:$0xff]
        %v1689 = vld [vmem:[#allocation4 + $0x52] sm:$0xff]
        %v1690 = vld [vmem:[#allocation4 + $0x62] sm:$0xff]
        %v1691 = vld [vmem:[#allocation4 + $0x72] sm:$0xff]
        %v1692 = vld [vmem:[#allocation4 + $0x82] sm:$0xff]
        %v1693 = vld [vmem:[#allocation4 + $0x92] sm:$0xff]
        %v1694 = vld [vmem:[#allocation4 + $0xa2] sm:$0xff]
        %v1695 = vld [vmem:[#allocation4 + $0xb2] sm:$0xff]
        %v1696 = vld [vmem:[#allocation4 + $0xc2] sm:$0xff]
        %v1697 = vld [vmem:[#allocation4 + $0xd2] sm:$0xff]
        %v1698 = vld [vmem:[#allocation4 + $0xe2] sm:$0xff]
        %v1699 = vld [vmem:[#allocation4 + $0xf2] sm:$0xff]
        %v1700 = vld [vmem:[#allocation4 + $0x102] sm:$0xff]
        %v1701 = vld [vmem:[#allocation4 + $0x112] sm:$0xff]
        %v1702 = vld [vmem:[#allocation4 + $0x122] sm:$0xff]
        %v1703 = vld [vmem:[#allocation4 + $0x132] sm:$0xff]
        %v1704 = vld [vmem:[#allocation4 + $0x142] sm:$0xff]
        %v1705 = vld [vmem:[#allocation4 + $0x152] sm:$0xff]
        %v1706 = vld [vmem:[#allocation4 + $0x162] sm:$0xff]
        %v1707 = vld [vmem:[#allocation4 + $0x172] sm:$0xff]
        %v1708 = vld [vmem:[#allocation4 + $0x182] sm:$0xff]
        %v1709 = vld [vmem:[#allocation4 + $0x192] sm:$0xff]
        %v1710 = vld [vmem:[#allocation4 + $0x1a2] sm:$0xff]
        %v1711 = vld [vmem:[#allocation4 + $0x1b2] sm:$0xff]
        %v1712 = vld [vmem:[#allocation4 + $0x1c2] sm:$0xff]
        %v1713 = vld [vmem:[#allocation4 + $0x1d2] sm:$0xff]
        %v1714 = vld [vmem:[#allocation4 + $0x1e2] sm:$0xff]
        %v1715 = vld [vmem:[#allocation4 + $0x1f2] sm:$0xff]
        %v1716 = vadd.f32 %v1652, %v1684
        %v1717 = vadd.f32 %v1653, %v1685
        %v1718 = vadd.f32 %v1654, %v1686
        %v1719 = vadd.f32 %v1655, %v1687
        %v1720 = vadd.f32 %v1656, %v1688
        %v1721 = vadd.f32 %v1657, %v1689
        %v1722 = vadd.f32 %v1658, %v1690
        %v1723 = vadd.f32 %v1659, %v1691
        %v1724 = vadd.f32 %v1660, %v1692
        %v1725 = vadd.f32 %v1661, %v1693
        %v1726 = vadd.f32 %v1662, %v1694
        %v1727 = vadd.f32 %v1663, %v1695
        %v1728 = vadd.f32 %v1664, %v1696
        %v1729 = vadd.f32 %v1665, %v1697
        %v1730 = vadd.f32 %v1666, %v1698
        %v1731 = vadd.f32 %v1667, %v1699
        %v1732 = vadd.f32 %v1668, %v1700
        %v1733 = vadd.f32 %v1669, %v1701
        %v1734 = vadd.f32 %v1670, %v1702
        %v1735 = vadd.f32 %v1671, %v1703
        %v1736 = vadd.f32 %v1672, %v1704
        %v1737 = vadd.f32 %v1673, %v1705
        %v1738 = vadd.f32 %v1674, %v1706
        %v1739 = vadd.f32 %v1675, %v1707
        %v1740 = vadd.f32 %v1676, %v1708
        %v1741 = vadd.f32 %v1677, %v1709
        %v1742 = vadd.f32 %v1678, %v1710
        %v1743 = vadd.f32 %v1679, %v1711
        %v1744 = vadd.f32 %v1680, %v1712
        %v1745 = vadd.f32 %v1681, %v1713
        %v1746 = vadd.f32 %v1682, %v1714
        %v1747 = vadd.f32 %v1683, %v1715
        %v1748 = vmul.f32 %v1716, 0.27406862
        %v1749 = vmul.f32 %v1717, 0.27406862
        %v1750 = vmul.f32 %v1718, 0.27406862
        %v1751 = vmul.f32 %v1719, 0.27406862
        %v1752 = vmul.f32 %v1720, 0.27406862
        %v1753 = vmul.f32 %v1721, 0.27406862
        %v1754 = vmul.f32 %v1722, 0.27406862
        %v1755 = vmul.f32 %v1723, 0.27406862
        %v1756 = vmul.f32 %v1724, 0.27406862
        %v1757 = vmul.f32 %v1725, 0.27406862
        %v1758 = vmul.f32 %v1726, 0.27406862
        %v1759 = vmul.f32 %v1727, 0.27406862
        %v1760 = vmul.f32 %v1728, 0.27406862
        %v1761 = vmul.f32 %v1729, 0.27406862
        %v1762 = vmul.f32 %v1730, 0.27406862
        %v1763 = vmul.f32 %v1731, 0.27406862
        %v1764 = vmul.f32 %v1732, 0.27406862
        %v1765 = vmul.f32 %v1733, 0.27406862
        %v1766 = vmul.f32 %v1734, 0.27406862
        %v1767 = vmul.f32 %v1735, 0.27406862
        %v1768 = vmul.f32 %v1736, 0.27406862
        %v1769 = vmul.f32 %v1737, 0.27406862
        %v1770 = vmul.f32 %v1738, 0.27406862
        %v1771 = vmul.f32 %v1739, 0.27406862
        %v1772 = vmul.f32 %v1740, 0.27406862
        %v1773 = vmul.f32 %v1741, 0.27406862
        %v1774 = vmul.f32 %v1742, 0.27406862
        %v1775 = vmul.f32 %v1743, 0.27406862
        %v1776 = vmul.f32 %v1744, 0.27406862
        %v1777 = vmul.f32 %v1745, 0.27406862
        %v1778 = vmul.f32 %v1746, 0.27406862
        %v1779 = vmul.f32 %v1747, 0.27406862
        %v1780 = vld [vmem:[#allocation4 + $0x1] sm:$0xff]
        %v1781 = vld [vmem:[#allocation4 + $0x11] sm:$0xff]
        %v1782 = vld [vmem:[#allocation4 + $0x21] sm:$0xff]
        %v1783 = vld [vmem:[#allocation4 + $0x31] sm:$0xff]
        %v1784 = vld [vmem:[#allocation4 + $0x41] sm:$0xff]
        %v1785 = vld [vmem:[#allocation4 + $0x51] sm:$0xff]
        %v1786 = vld [vmem:[#allocation4 + $0x61] sm:$0xff]
        %v1787 = vld [vmem:[#allocation4 + $0x71] sm:$0xff]
        %v1788 = vld [vmem:[#allocation4 + $0x81] sm:$0xff]
        %v1789 = vld [vmem:[#allocation4 + $0x91] sm:$0xff]
        %v1790 = vld [vmem:[#allocation4 + $0xa1] sm:$0xff]
        %v1791 = vld [vmem:[#allocation4 + $0xb1] sm:$0xff]
        %v1792 = vld [vmem:[#allocation4 + $0xc1] sm:$0xff]
        %v1793 = vld [vmem:[#allocation4 + $0xd1] sm:$0xff]
        %v1794 = vld [vmem:[#allocation4 + $0xe1] sm:$0xff]
        %v1795 = vld [vmem:[#allocation4 + $0xf1] sm:$0xff]
        %v1796 = vld [vmem:[#allocation4 + $0x101] sm:$0xff]
        %v1797 = vld [vmem:[#allocation4 + $0x111] sm:$0xff]
        %v1798 = vld [vmem:[#allocation4 + $0x121] sm:$0xff]
        %v1799 = vld [vmem:[#allocation4 + $0x131] sm:$0xff]
        %v1800 = vld [vmem:[#allocation4 + $0x141] sm:$0xff]
        %v1801 = vld [vmem:[#allocation4 + $0x151] sm:$0xff]
        %v1802 = vld [vmem:[#allocation4 + $0x161] sm:$0xff]
        %v1803 = vld [vmem:[#allocation4 + $0x171] sm:$0xff]
        %v1804 = vld [vmem:[#allocation4 + $0x181] sm:$0xff]
        %v1805 = vld [vmem:[#allocation4 + $0x191] sm:$0xff]
        %v1806 = vld [vmem:[#allocation4 + $0x1a1] sm:$0xff]
        %v1807 = vld [vmem:[#allocation4 + $0x1b1] sm:$0xff]
        %v1808 = vld [vmem:[#allocation4 + $0x1c1] sm:$0xff]
        %v1809 = vld [vmem:[#allocation4 + $0x1d1] sm:$0xff]
        %v1810 = vld [vmem:[#allocation4 + $0x1e1] sm:$0xff]
        %v1811 = vld [vmem:[#allocation4 + $0x1f1] sm:$0xff]
        %v1812 = vmul.f32 %v1780, 0.45186275
        %v1813 = vmul.f32 %v1781, 0.45186275
        %v1814 = vmul.f32 %v1782, 0.45186275
        %v1815 = vmul.f32 %v1783, 0.45186275
        %v1816 = vmul.f32 %v1784, 0.45186275
        %v1817 = vmul.f32 %v1785, 0.45186275
        %v1818 = vmul.f32 %v1786, 0.45186275
        %v1819 = vmul.f32 %v1787, 0.45186275
        %v1820 = vmul.f32 %v1788, 0.45186275
        %v1821 = vmul.f32 %v1789, 0.45186275
        %v1822 = vmul.f32 %v1790, 0.45186275
        %v1823 = vmul.f32 %v1791, 0.45186275
        %v1824 = vmul.f32 %v1792, 0.45186275
        %v1825 = vmul.f32 %v1793, 0.45186275
        %v1826 = vmul.f32 %v1794, 0.45186275
        %v1827 = vmul.f32 %v1795, 0.45186275
        %v1828 = vmul.f32 %v1796, 0.45186275
        %v1829 = vmul.f32 %v1797, 0.45186275
        %v1830 = vmul.f32 %v1798, 0.45186275
        %v1831 = vmul.f32 %v1799, 0.45186275
        %v1832 = vmul.f32 %v1800, 0.45186275
        %v1833 = vmul.f32 %v1801, 0.45186275
        %v1834 = vmul.f32 %v1802, 0.45186275
        %v1835 = vmul.f32 %v1803, 0.45186275
        %v1836 = vmul.f32 %v1804, 0.45186275
        %v1837 = vmul.f32 %v1805, 0.45186275
        %v1838 = vmul.f32 %v1806, 0.45186275
        %v1839 = vmul.f32 %v1807, 0.45186275
        %v1840 = vmul.f32 %v1808, 0.45186275
        %v1841 = vmul.f32 %v1809, 0.45186275
        %v1842 = vmul.f32 %v1810, 0.45186275
        %v1843 = vmul.f32 %v1811, 0.45186275
        %v1844 = vadd.f32 %v1748, %v1812
        %v1845 = vadd.f32 %v1749, %v1813
        %v1846 = vadd.f32 %v1750, %v1814
        %v1847 = vadd.f32 %v1751, %v1815
        %v1848 = vadd.f32 %v1752, %v1816
        %v1849 = vadd.f32 %v1753, %v1817
        %v1850 = vadd.f32 %v1754, %v1818
        %v1851 = vadd.f32 %v1755, %v1819
        %v1852 = vadd.f32 %v1756, %v1820
        %v1853 = vadd.f32 %v1757, %v1821
        %v1854 = vadd.f32 %v1758, %v1822
        %v1855 = vadd.f32 %v1759, %v1823
        %v1856 = vadd.f32 %v1760, %v1824
        %v1857 = vadd.f32 %v1761, %v1825
        %v1858 = vadd.f32 %v1762, %v1826
        %v1859 = vadd.f32 %v1763, %v1827
        %v1860 = vadd.f32 %v1764, %v1828
        %v1861 = vadd.f32 %v1765, %v1829
        %v1862 = vadd.f32 %v1766, %v1830
        %v1863 = vadd.f32 %v1767, %v1831
        %v1864 = vadd.f32 %v1768, %v1832
        %v1865 = vadd.f32 %v1769, %v1833
        %v1866 = vadd.f32 %v1770, %v1834
        %v1867 = vadd.f32 %v1771, %v1835
        %v1868 = vadd.f32 %v1772, %v1836
        %v1869 = vadd.f32 %v1773, %v1837
        %v1870 = vadd.f32 %v1774, %v1838
        %v1871 = vadd.f32 %v1775, %v1839
        %v1872 = vadd.f32 %v1776, %v1840
        %v1873 = vadd.f32 %v1777, %v1841
        %v1874 = vadd.f32 %v1778, %v1842
        %v1875 = vadd.f32 %v1779, %v1843
        %1876 = vst.msk [vmem:[%s215] sm:$0xff] %vm333, %v1844
        %1877 = vst.msk [vmem:[%s215 + $0x8] sm:$0xff] %vm333, %v1845
        %1878 = vst.msk [vmem:[%s215 + $0x10] sm:$0xff] %vm333, %v1846
        %1879 = vst.msk [vmem:[%s215 + $0x18] sm:$0xff] %vm333, %v1847
        %1880 = vst.msk [vmem:[%s215 + $0x20] sm:$0xff] %vm333, %v1848
        %1881 = vst.msk [vmem:[%s215 + $0x28] sm:$0xff] %vm333, %v1849
        %1882 = vst.msk [vmem:[%s215 + $0x30] sm:$0xff] %vm333, %v1850
        %1883 = vst.msk [vmem:[%s215 + $0x38] sm:$0xff] %vm333, %v1851
        %1884 = vst.msk [vmem:[%s215 + $0x40] sm:$0xff] %vm333, %v1852
        %1885 = vst.msk [vmem:[%s215 + $0x48] sm:$0xff] %vm333, %v1853
        %1886 = vst.msk [vmem:[%s215 + $0x50] sm:$0xff] %vm333, %v1854
        %1887 = vst.msk [vmem:[%s215 + $0x58] sm:$0xff] %vm333, %v1855
        %1888 = vst.msk [vmem:[%s215 + $0x60] sm:$0xff] %vm333, %v1856
        %1889 = vst.msk [vmem:[%s215 + $0x68] sm:$0xff] %vm333, %v1857
        %1890 = vst.msk [vmem:[%s215 + $0x70] sm:$0xff] %vm333, %v1858
        %1891 = vst.msk [vmem:[%s215 + $0x78] sm:$0xff] %vm333, %v1859
        %1892 = vst.msk [vmem:[%s215 + $0x80] sm:$0xff] %vm333, %v1860
        %1893 = vst.msk [vmem:[%s215 + $0x88] sm:$0xff] %vm333, %v1861
        %1894 = vst.msk [vmem:[%s215 + $0x90] sm:$0xff] %vm333, %v1862
        %1895 = vst.msk [vmem:[%s215 + $0x98] sm:$0xff] %vm333, %v1863
        %1896 = vst.msk [vmem:[%s215 + $0xa0] sm:$0xff] %vm333, %v1864
        %1897 = vst.msk [vmem:[%s215 + $0xa8] sm:$0xff] %vm333, %v1865
        %1898 = vst.msk [vmem:[%s215 + $0xb0] sm:$0xff] %vm333, %v1866
        %1899 = vst.msk [vmem:[%s215 + $0xb8] sm:$0xff] %vm333, %v1867
        %1900 = vst.msk [vmem:[%s215 + $0xc0] sm:$0xff] %vm333, %v1868
        %1901 = vst.msk [vmem:[%s215 + $0xc8] sm:$0xff] %vm333, %v1869
        %1902 = vst.msk [vmem:[%s215 + $0xd0] sm:$0xff] %vm333, %v1870
        %1903 = vst.msk [vmem:[%s215 + $0xd8] sm:$0xff] %vm333, %v1871
        %1904 = vst.msk [vmem:[%s215 + $0xe0] sm:$0xff] %vm333, %v1872
        %1905 = vst.msk [vmem:[%s215 + $0xe8] sm:$0xff] %vm333, %v1873
        %1906 = vst.msk [vmem:[%s215 + $0xf0] sm:$0xff] %vm333, %v1874
        %1907 = vst.msk [vmem:[%s215 + $0xf8] sm:$0xff] %vm333, %v1875
        %s1908 = sand.u32 %s98, 1
        %s1909 = scalar_lea.sflag [#allocation6], %s1908
        %s1910 = sand.u32 %s98, 1
        %s1911 = smul.addr %s1910, 256
        %s1912 = scalar_lea.vmem [#allocation5], %s1911
        // Predicated region
        $region29: #{tpu_custom_call.1} parent=27 // pred_check
          %p1913 = pneg %p108
        $region30: #{tpu_custom_call.1} parent=27 // pred_check_branch
          %1915 = sbr.rel (%p1913) target = $region32
        $region31: #{tpu_custom_call.1} parent=27 // pred_region
          %s1916 = smul.u32 4, %s21
          %s1918 = ssub.s32 4096, 4096
          %1919 = vsyncadd %s1909, %s1918
          %s1920 = smul.addr %s1916, 8
          %s1921 = sadd.s32 %s20, %s1920
          %s1922 = smul.addr %s1921, 128
          %s1923 = scalar_lea.hbm %s2, %s1922
          %s1924 = sshll.u32 %s1912, 4
          %s1925 = int_to_ptr.vmem [resolvable:$true] %s1924
          %1930 = dma.vmem_to_hbm [thread:$0]  %s1925, 4096, %s1923, %s1909, 128, 128, 8
        $region32: #{tpu_custom_call.1} parent=27 // pred_fallthru
          _
      $region28: #{tpu_custom_call.1} parent=5 // pred_fallthru
        _
      %p1931 = scmp.le.s32.totalorder 2, %s11
      // Predicated region
      $region33: #{tpu_custom_call.1} parent=5 // pred_check
        %p1932 = pneg %p1931
      $region34: #{tpu_custom_call.1} parent=5 // pred_check_branch
        %1934 = sbr.rel (%p1932) target = $region36
      $region35: #{tpu_custom_call.1} parent=5 // pred_region
        %s1935 = ssub.s32 %s11, 2
        // Predicated region
        $region37: #{tpu_custom_call.1} parent=35 // pred_check
          %p1936 = pneg %p114
        $region38: #{tpu_custom_call.1} parent=35 // pred_check_branch
          %1938 = sbr.rel (%p1936) target = $region40
        $region39: #{tpu_custom_call.1} parent=35 // pred_region
          %s1939 = sand.u32 %s99, 1
          %s1940 = scalar_lea.sflag [#allocation6], %s1939
          %s1941 = sand.u32 %s99, 1
          %s1942 = smul.addr %s1941, 256
          %s1943 = scalar_lea.vmem [#allocation5], %s1942
          %1944 = dma.done %s1940, 4096
        $region40: #{tpu_custom_call.1} parent=35 // pred_fallthru
          _
      $region36: #{tpu_custom_call.1} parent=5 // pred_fallthru
        _
    $region6: #{tpu_custom_call.1} parent=1 // loop_footer
      %s15 = sadd.s32 1, %s11
    $region7: #{tpu_custom_call.1} parent=1 // loop_footer_branch
      %10 = sbr.rel target = $region3
    $region8: #{tpu_custom_call.1} parent=1 // loop_exit
      _
    %1945 = vsyncpa [#allocation6], 1
    %s1946 = scalar_lea.sflag [#allocation6], 1
    %1947 = vsyncpa %s1946, 1

</llo_original>
